<compile_context>
chip_gen: v5e
topology: v5e:2x2
jax: 0.10.0
libtpu: 0.0.40
codegen_flags: <defaults>
</compile_context>

<pallas_src>
import jax
import jax.numpy as jnp
from jax import lax
from jax.experimental import pallas as pl
from jax.experimental.pallas import tpu as pltpu

TILE_B = 128  # batch rows per grid step (matches the 128-row MXU tile on v5e/v6e)


def _agent_kernel(x_ref, w1_ref, b1_ref, w2_ref, b2_ref, w3_ref, b3_ref,
                  probs_ref, action_ref):
    # Layer 1: Linear + ReLU   (bf16 x bf16 -> f32 accumulate on the MXU)
    x = x_ref[...].astype(jnp.bfloat16)                               # (TB, S)
    h1 = jnp.dot(x, w1_ref[...], preferred_element_type=jnp.float32) + b1_ref[...]
    h1 = jnp.maximum(h1, 0.0)                                         # (TB, H1) f32

    # Layer 2: Linear + ReLU
    h2 = jnp.dot(h1.astype(jnp.bfloat16), w2_ref[...],
                 preferred_element_type=jnp.float32) + b2_ref[...]
    h2 = jnp.maximum(h2, 0.0)                                         # (TB, H2) f32

    # Layer 3: Linear (logits)
    logits = jnp.dot(h2.astype(jnp.bfloat16), w3_ref[...],
                     preferred_element_type=jnp.float32) + b3_ref[...]  # (TB, A)

    # argmax straight from logits (softmax is order-preserving); first-max
    # tie-break, same as np.argmax.
    m = jnp.max(logits, axis=-1, keepdims=True)                       # (TB, 1)
    a = logits.shape[-1]
    col = lax.broadcasted_iota(jnp.int32, logits.shape, 1)
    idx = jnp.min(jnp.where(logits == m, col, a), axis=-1, keepdims=True)
    action_ref[...] = idx.astype(jnp.int32)

    # Softmax along last dim (matches F.softmax(x, dim=-1)); exact reciprocal.
    e = jnp.exp(logits - m)
    inv = pl.reciprocal(jnp.sum(e, axis=-1, keepdims=True), approx=False)
    probs_ref[...] = e * inv


def agent_forward(states, params):
    """states: (S,) or (B, S) float32.
    Returns (actions int32 (B,), probs f32 (B, A)); scalar / (A,) for 1-D input."""
    single = states.ndim == 1
    x = states.reshape(1, -1) if single else states
    x = x.astype(jnp.float32)
    b, s_size = x.shape
    h1 = params["w1"].shape[-1]
    h2 = params["w2"].shape[-1]
    a_size = params["w3"].shape[-1]

    # Pad batch up to a multiple of TILE_B (padded rows are discarded).
    b_pad = pl.cdiv(b, TILE_B) * TILE_B
    if b_pad != b:
        x = jnp.pad(x, ((0, b_pad - b), (0, 0)))
    nb = b_pad // TILE_B

    batch_spec = lambda shape: pl.BlockSpec(shape, lambda i: (i, 0))
    const_spec = lambda shape: pl.BlockSpec(shape, lambda i: (0, 0))  # VMEM-resident

    probs, actions = pl.pallas_call(
        _agent_kernel,
        out_shape=(
            jax.ShapeDtypeStruct((b_pad, a_size), jnp.float32),
            jax.ShapeDtypeStruct((b_pad, 1), jnp.int32),
        ),
        grid=(nb,),
        in_specs=[
            batch_spec((TILE_B, s_size)),
            const_spec((s_size, h1)), const_spec((1, h1)),
            const_spec((h1, h2)),     const_spec((1, h2)),
            const_spec((h2, a_size)), const_spec((1, a_size)),
        ],
        out_specs=(
            batch_spec((TILE_B, a_size)),
            batch_spec((TILE_B, 1)),
        ),
        compiler_params=pltpu.CompilerParams(
            dimension_semantics=("parallel",)),
    )(x, params["w1"], params["b1"], params["w2"], params["b2"],
      params["w3"], params["b3"])

    probs = probs[:b]
    actions = actions[:b, 0]
    if single:
        return actions[0], probs[0]
    return actions, probs


def init_params(key, s_size, h_sizes, a_size):
    """nn.Linear-style init (uniform +/- 1/sqrt(fan_in)). Weights stored as
    (in, out) = transpose of PyTorch's (out, in), cast to bf16 (halves weight
    DMA; MXU is bf16-native, accumulation stays f32). Biases stay f32."""
    sizes = [s_size] + list(h_sizes) + [a_size]
    params = {}
    for i in range(len(sizes) - 1):
        fan_in, fan_out = sizes[i], sizes[i + 1]
        key, kw, kb = jax.random.split(key, 3)
        bound = 1.0 / (fan_in ** 0.5)
        params[f"w{i+1}"] = jax.random.uniform(
            kw, (fan_in, fan_out), jnp.float32, -bound, bound).astype(jnp.bfloat16)
        params[f"b{i+1}"] = jax.random.uniform(
            kb, (1, fan_out), jnp.float32, -bound, bound)
    return params


def _reference_forward(states, params):
    """Pure-JAX reference with the same bf16-weight / f32-accumulate numerics."""
    x = states.reshape(-1, states.shape[-1]).astype(jnp.float32)
    h1 = jnp.maximum(jnp.dot(x.astype(jnp.bfloat16), params["w1"],
                             preferred_element_type=jnp.float32) + params["b1"], 0.0)
    h2 = jnp.maximum(jnp.dot(h1.astype(jnp.bfloat16), params["w2"],
                             preferred_element_type=jnp.float32) + params["b2"], 0.0)
    logits = jnp.dot(h2.astype(jnp.bfloat16), params["w3"],
                     preferred_element_type=jnp.float32) + params["b3"]
    probs = jax.nn.softmax(logits, axis=-1)
    # argmax(probs) == argmax(logits): softmax is order-preserving.
    return jnp.argmax(logits, axis=-1).astype(jnp.int32), probs


if __name__ == "__main__":
    # Shapes consistent with the module: state_size=8, h_sizes=[256,128], action_size=4.
    S_SIZE, H_SIZES, A_SIZE = 8, [256, 128], 4
    B = 256  # two 128-row batch tiles -> grid=(2,)

    key = jax.random.PRNGKey(0)
    kp, ks = jax.random.split(key)
    params = init_params(kp, S_SIZE, H_SIZES, A_SIZE)
    states = jax.random.normal(ks, (B, S_SIZE), jnp.float32)

    actions, probs = agent_forward(states, params)
    actions = jax.block_until_ready(actions)
    probs = jax.block_until_ready(probs)

    ref_actions, ref_probs = _reference_forward(states, params)
    assert actions.shape == (B,) and probs.shape == (B, A_SIZE)
    assert jnp.array_equal(actions, ref_actions), "action mismatch"
    assert jnp.allclose(probs, ref_probs, atol=1e-4, rtol=1e-4), \
        float(jnp.max(jnp.abs(probs - ref_probs)))

    # Original module's single-state path (padded internally to one tile).
    a0, p0 = agent_forward(states[0], params)
    a0 = jax.block_until_ready(a0)
    assert int(a0) == int(ref_actions[0])
    assert jnp.allclose(p0, ref_probs[0], atol=1e-4, rtol=1e-4)

    print("KERNEL_OK")
</pallas_src>

<mosaic_0001>
module attributes {stable_mosaic.version = 11 : i64} {
  func.func @_agent_kernel(%arg0: i32, %arg1: memref<128x8xf32, #tpu.memory_space<vmem>>, %arg2: memref<8x256xbf16, #tpu.memory_space<vmem>>, %arg3: memref<1x256xf32, #tpu.memory_space<vmem>>, %arg4: memref<256x128xbf16, #tpu.memory_space<vmem>>, %arg5: memref<1x128xf32, #tpu.memory_space<vmem>>, %arg6: memref<128x4xbf16, #tpu.memory_space<vmem>>, %arg7: memref<1x4xf32, #tpu.memory_space<vmem>>, %arg8: memref<128x4xf32, #tpu.memory_space<vmem>>, %arg9: memref<128x1xi32, #tpu.memory_space<vmem>>) attributes {dimension_semantics = [#tpu.dimension_semantics<parallel>], iteration_bounds = array<i64: 2>, scalar_prefetch = 0 : i64, scratch_operands = 0 : i64, tpu.core_type = #tpu.core_type<tc>, window_params = [{transform_indices = @transform_0, window_bounds = array<i64: 128, 8>}, {pipeline_mode = #tpu.pipeline_mode<synchronous>, transform_indices = @transform_1, window_bounds = array<i64: 8, 256>}, {pipeline_mode = #tpu.pipeline_mode<synchronous>, transform_indices = @transform_2, window_bounds = array<i64: 1, 256>}, {pipeline_mode = #tpu.pipeline_mode<synchronous>, transform_indices = @transform_3, window_bounds = array<i64: 256, 128>}, {pipeline_mode = #tpu.pipeline_mode<synchronous>, transform_indices = @transform_4, window_bounds = array<i64: 1, 128>}, {pipeline_mode = #tpu.pipeline_mode<synchronous>, transform_indices = @transform_5, window_bounds = array<i64: 128, 4>}, {pipeline_mode = #tpu.pipeline_mode<synchronous>, transform_indices = @transform_6, window_bounds = array<i64: 1, 4>}, {transform_indices = @transform_7, window_bounds = array<i64: 128, 4>}, {transform_indices = @transform_8, window_bounds = array<i64: 128, 1>}]} {
    %c0 = arith.constant 0 : index
    %c0_0 = arith.constant 0 : index
    %0 = vector.load %arg1[%c0, %c0_0] : memref<128x8xf32, #tpu.memory_space<vmem>>, vector<128x8xf32>
    %1 = arith.truncf %0 : vector<128x8xf32> to vector<128x8xbf16>
    %c0_1 = arith.constant 0 : index
    %c0_2 = arith.constant 0 : index
    %2 = vector.load %arg2[%c0_1, %c0_2] : memref<8x256xbf16, #tpu.memory_space<vmem>>, vector<8x256xbf16>
    %cst = arith.constant dense<0.000000e+00> : vector<128x256xf32>
    %3 = tpu.matmul %1, %2, %cst {dimension_numbers = #tpu.dot_dimension_numbers<[1], [0], [0], [1], [0, 0, 1, 1], [], []>} : vector<128x8xbf16>, vector<8x256xbf16>, vector<128x256xf32> -> vector<128x256xf32>
    %c0_3 = arith.constant 0 : index
    %c0_4 = arith.constant 0 : index
    %4 = vector.load %arg3[%c0_3, %c0_4] : memref<1x256xf32, #tpu.memory_space<vmem>>, vector<1x256xf32>
    %5 = vector.broadcast %4 : vector<1x256xf32> to vector<128x256xf32>
    %6 = arith.addf %3, %5 : vector<128x256xf32>
    %cst_5 = arith.constant 0.000000e+00 : f32
    %7 = vector.broadcast %cst_5 : f32 to vector<128x256xf32>
    %8 = arith.maximumf %6, %7 : vector<128x256xf32>
    %9 = arith.truncf %8 : vector<128x256xf32> to vector<128x256xbf16>
    %c0_6 = arith.constant 0 : index
    %c0_7 = arith.constant 0 : index
    %10 = vector.load %arg4[%c0_6, %c0_7] : memref<256x128xbf16, #tpu.memory_space<vmem>>, vector<256x128xbf16>
    %cst_8 = arith.constant dense<0.000000e+00> : vector<128x128xf32>
    %11 = tpu.matmul %9, %10, %cst_8 {dimension_numbers = #tpu.dot_dimension_numbers<[1], [0], [0], [1], [0, 0, 1, 1], [], []>} : vector<128x256xbf16>, vector<256x128xbf16>, vector<128x128xf32> -> vector<128x128xf32>
    %c0_9 = arith.constant 0 : index
    %c0_10 = arith.constant 0 : index
    %12 = vector.load %arg5[%c0_9, %c0_10] : memref<1x128xf32, #tpu.memory_space<vmem>>, vector<1x128xf32>
    %13 = vector.broadcast %12 : vector<1x128xf32> to vector<128x128xf32>
    %14 = arith.addf %11, %13 : vector<128x128xf32>
    %cst_11 = arith.constant 0.000000e+00 : f32
    %15 = vector.broadcast %cst_11 : f32 to vector<128x128xf32>
    %16 = arith.maximumf %14, %15 : vector<128x128xf32>
    %17 = arith.truncf %16 : vector<128x128xf32> to vector<128x128xbf16>
    %c0_12 = arith.constant 0 : index
    %c0_13 = arith.constant 0 : index
    %18 = vector.load %arg6[%c0_12, %c0_13] : memref<128x4xbf16, #tpu.memory_space<vmem>>, vector<128x4xbf16>
    %cst_14 = arith.constant dense<0.000000e+00> : vector<128x4xf32>
    %19 = tpu.matmul %17, %18, %cst_14 {dimension_numbers = #tpu.dot_dimension_numbers<[1], [0], [0], [1], [0, 0, 1, 1], [], []>} : vector<128x128xbf16>, vector<128x4xbf16>, vector<128x4xf32> -> vector<128x4xf32>
    %c0_15 = arith.constant 0 : index
    %c0_16 = arith.constant 0 : index
    %20 = vector.load %arg7[%c0_15, %c0_16] : memref<1x4xf32, #tpu.memory_space<vmem>>, vector<1x4xf32>
    %21 = vector.broadcast %20 : vector<1x4xf32> to vector<128x4xf32>
    %22 = arith.addf %19, %21 : vector<128x4xf32>
    %cst_17 = arith.constant dense<0xFF800000> : vector<128xf32>
    %23 = vector.multi_reduction <maximumf>, %22, %cst_17 [1] : vector<128x4xf32> to vector<128xf32>
    %24 = vector.shape_cast %23 : vector<128xf32> to vector<128x1xf32>
    %25 = tpu.iota {dimensions = array<i32: 1>} : vector<128x4xi32>
    %26 = vector.broadcast %24 : vector<128x1xf32> to vector<128x4xf32>
    %27 = arith.cmpf oeq, %22, %26 : vector<128x4xf32>
    %c4_i32 = arith.constant 4 : i32
    %28 = vector.broadcast %c4_i32 : i32 to vector<128x4xi32>
    %29 = arith.select %27, %25, %28 : vector<128x4xi1>, vector<128x4xi32>
    %cst_18 = arith.constant dense<2147483647> : vector<128xi32>
    %30 = vector.multi_reduction <minsi>, %29, %cst_18 [1] : vector<128x4xi32> to vector<128xi32>
    %31 = vector.shape_cast %30 : vector<128xi32> to vector<128x1xi32>
    %c0_19 = arith.constant 0 : index
    %c0_20 = arith.constant 0 : index
    %32 = vector.load %arg9[%c0_19, %c0_20] : memref<128x1xi32, #tpu.memory_space<vmem>>, vector<128x1xi32>
    tpu.vector_store %arg9[%c0_19, %c0_20], %31 {strides = array<i32>} : memref<128x1xi32, #tpu.memory_space<vmem>>, vector<128x1xi32>,
    %33 = vector.broadcast %24 : vector<128x1xf32> to vector<128x4xf32>
    %34 = arith.subf %22, %33 : vector<128x4xf32>
    %35 = math.exp %34 : vector<128x4xf32>
    %cst_21 = arith.constant dense<0.000000e+00> : vector<128xf32>
    %36 = vector.multi_reduction <add>, %35, %cst_21 [1] : vector<128x4xf32> to vector<128xf32>
    %37 = vector.shape_cast %36 : vector<128xf32> to vector<128x1xf32>
    %38 = tpu.reciprocal %37 : vector<128x1xf32> -> vector<128x1xf32>
    %39 = vector.broadcast %38 : vector<128x1xf32> to vector<128x4xf32>
    %40 = arith.mulf %35, %39 : vector<128x4xf32>
    %c0_22 = arith.constant 0 : index
    %c0_23 = arith.constant 0 : index
    %41 = vector.load %arg8[%c0_22, %c0_23] : memref<128x4xf32, #tpu.memory_space<vmem>>, vector<128x4xf32>
    tpu.vector_store %arg8[%c0_22, %c0_23], %40 {strides = array<i32>} : memref<128x4xf32, #tpu.memory_space<vmem>>, vector<128x4xf32>,
    return
  }
  func.func @transform_0(%arg0: i32) -> (i32, i32) {
    %c0_i32 = arith.constant 0 : i32
    %c0_i32_0 = arith.constant 0 : i32
    return %arg0, %c0_i32 : i32, i32
  }
  func.func @transform_1(%arg0: i32) -> (i32, i32) {
    %c0_i32 = arith.constant 0 : i32
    %c0_i32_0 = arith.constant 0 : i32
    %c0_i32_1 = arith.constant 0 : i32
    return %c0_i32, %c0_i32_0 : i32, i32
  }
  func.func @transform_2(%arg0: i32) -> (i32, i32) {
    %c0_i32 = arith.constant 0 : i32
    %c0_i32_0 = arith.constant 0 : i32
    %c0_i32_1 = arith.constant 0 : i32
    return %c0_i32, %c0_i32_0 : i32, i32
  }
  func.func @transform_3(%arg0: i32) -> (i32, i32) {
    %c0_i32 = arith.constant 0 : i32
    %c0_i32_0 = arith.constant 0 : i32
    %c0_i32_1 = arith.constant 0 : i32
    return %c0_i32, %c0_i32_0 : i32, i32
  }
  func.func @transform_4(%arg0: i32) -> (i32, i32) {
    %c0_i32 = arith.constant 0 : i32
    %c0_i32_0 = arith.constant 0 : i32
    %c0_i32_1 = arith.constant 0 : i32
    return %c0_i32, %c0_i32_0 : i32, i32
  }
  func.func @transform_5(%arg0: i32) -> (i32, i32) {
    %c0_i32 = arith.constant 0 : i32
    %c0_i32_0 = arith.constant 0 : i32
    %c0_i32_1 = arith.constant 0 : i32
    return %c0_i32, %c0_i32_0 : i32, i32
  }
  func.func @transform_6(%arg0: i32) -> (i32, i32) {
    %c0_i32 = arith.constant 0 : i32
    %c0_i32_0 = arith.constant 0 : i32
    %c0_i32_1 = arith.constant 0 : i32
    return %c0_i32, %c0_i32_0 : i32, i32
  }
  func.func @transform_7(%arg0: i32) -> (i32, i32) {
    %c0_i32 = arith.constant 0 : i32
    %c0_i32_0 = arith.constant 0 : i32
    return %arg0, %c0_i32 : i32, i32
  }
  func.func @transform_8(%arg0: i32) -> (i32, i32) {
    %c0_i32 = arith.constant 0 : i32
    %c0_i32_0 = arith.constant 0 : i32
    return %arg0, %c0_i32 : i32, i32
  }
}

</mosaic_0001>

<llo_original>
// kernel: tpu_custom_call.1
$region0: #{tpu_custom_call.1}
  #allocation0 [shape = 'u32[]', space=smem, size = 0x4, offset = 0x4, fixed_abs, tag = 'smem constant byte address 0x4 - core index']
  #allocation1 [shape = 'u32[72,128]{1,0:T(1,128)}', space=vmem, size = 0x9000, scoped, tag = 'internal scratch']
  %s0 = inlined_call_operand.vmem [shape: f32[256,8], index: 0, kind: input, shape index: {}]
  %s1 = inlined_call_operand.vmem [shape: bf16[8,256], index: 1, kind: input, shape index: {}]
  %s2 = inlined_call_operand.vmem [shape: f32[1,256], index: 2, kind: input, shape index: {}]
  %s3 = inlined_call_operand.vmem [shape: bf16[256,128], index: 3, kind: input, shape index: {}]
  %s4 = inlined_call_operand.vmem [shape: f32[1,128], index: 4, kind: input, shape index: {}]
  %s5 = inlined_call_operand.vmem [shape: bf16[128,4], index: 5, kind: input, shape index: {}]
  %s6 = inlined_call_operand.vmem [shape: f32[1,4], index: 6, kind: input, shape index: {}]
  %s7 = inlined_call_operand.vmem [shape: f32[256,4], index: 7, kind: output, shape index: {0}]
  %s8 = inlined_call_operand.vmem [shape: s32[256,1], index: 8, kind: output, shape index: {1}]
  %9 = xla_tuple %s7, %s8
  %s10 = sld [smem:[#allocation0]]
  $region69: #{tpu_custom_call.1} parent=0
    _
  %s12 = ssub.s32 1, %s10
  %s13 = scalar_select 0, %s12, %s10
  loop: start=0, step=1, limit=4
  $region2: #{tpu_custom_call.1} parent=0 // loop_pre_header
    _
  $region3: #{tpu_custom_call.1} parent=0 // loop_header
    %s15 = sphi 0, %s19
    %p16 = scmp.ge.s32.totalorder %s15, 4
    %s25 = sphi 0, %s27
    %s28 = sphi 0, %s25
    %s29 = sphi 0, %s28
    %s45 = sphi 0, %s29
    %s49 = sphi 0, %s49
    %s51 = sphi 0, %s49
    %s52 = sphi 0, %s51
    %s66 = sphi 0, %s52
    %s70 = sphi 0, %s70
    %s72 = sphi 0, %s70
    %s73 = sphi 0, %s72
    %s87 = sphi 0, %s73
    %s91 = sphi 0, %s91
    %s93 = sphi 0, %s91
    %s94 = sphi 0, %s93
    %s108 = sphi 0, %s94
    %s112 = sphi 0, %s112
    %s114 = sphi 0, %s112
    %s115 = sphi 0, %s114
    %s129 = sphi 0, %s115
    %s133 = sphi 0, %s133
    %s135 = sphi 0, %s133
    %s136 = sphi 0, %s135
    %s150 = sphi 0, %s136
    %s154 = sphi 0, %s154
    %s156 = sphi 0, %s154
    %s157 = sphi 0, %s156
    %s171 = sphi 0, %s157
    %s177 = sphi 0, %s179
    %s180 = sphi 0, %s177
    %s181 = sphi 0, %s180
    %s197 = sphi 0, %s181
    %s203 = sphi 0, %s205
    %s206 = sphi 0, %s203
    %s207 = sphi 0, %s206
    %s223 = sphi 0, %s207
  $region4: #{tpu_custom_call.1} parent=0 // loop_header_branch
    %18 = sbr.rel (%p16) target = $region8
  $region5: #{tpu_custom_call.1} parent=0 // loop_body
    %s20 = ssub.s32 %s15, 1
    %s21 = ssub.s32 %s15, 2
    %s22 = sadd.s32 %s15, 1
    %s23 = ssub.s32 %s15, %s22
    %p24 = scmp.eq.s32.totalorder %s23, 0
    %s26 = sadd.s32 %s25, 1
    %s27 = scalar_select %p24, %s25, %s26
    %p30 = pneg %p24
    %p31 = scmp.eq.s32.totalorder %s15, 1
    %p32 = por %p30, %p31
    %p33 = scmp.ne.s32.totalorder %s25, %s28
    %p34 = scmp.eq.s32.totalorder %s15, 0
    %p35 = por %p33, %p34
    %p36 = scmp.ne.s32.totalorder %s25, %s28
    %p37 = scmp.eq.s32.totalorder %s20, 1
    %p38 = por %p36, %p37
    %p39 = scmp.ne.s32.totalorder %s28, %s29
    %p40 = scmp.eq.s32.totalorder %s20, 0
    %p41 = por %p39, %p40
    %p42 = scmp.ne.s32.totalorder %s28, %s29
    %p43 = scmp.eq.s32.totalorder %s21, 1
    %p44 = por %p42, %p43
    %p46 = scmp.ne.s32.totalorder %s29, %s45
    %p47 = scmp.eq.s32.totalorder %s21, 0
    %p48 = por %p46, %p47
    %s50 = sadd.s32 %s49, 1
    %p53 = scmp.eq.s32.totalorder %s15, 1
    %p54 = scmp.ne.s32.totalorder %s49, %s51
    %p55 = scmp.eq.s32.totalorder %s15, 0
    %p56 = por %p54, %p55
    %p57 = scmp.ne.s32.totalorder %s49, %s51
    %p58 = scmp.eq.s32.totalorder %s20, 1
    %p59 = por %p57, %p58
    %p60 = scmp.ne.s32.totalorder %s51, %s52
    %p61 = scmp.eq.s32.totalorder %s20, 0
    %p62 = por %p60, %p61
    %p63 = scmp.ne.s32.totalorder %s51, %s52
    %p64 = scmp.eq.s32.totalorder %s21, 1
    %p65 = por %p63, %p64
    %p67 = scmp.ne.s32.totalorder %s52, %s66
    %p68 = scmp.eq.s32.totalorder %s21, 0
    %p69 = por %p67, %p68
    %s71 = sadd.s32 %s70, 1
    %p74 = scmp.eq.s32.totalorder %s15, 1
    %p75 = scmp.ne.s32.totalorder %s70, %s72
    %p76 = scmp.eq.s32.totalorder %s15, 0
    %p77 = por %p75, %p76
    %p78 = scmp.ne.s32.totalorder %s70, %s72
    %p79 = scmp.eq.s32.totalorder %s20, 1
    %p80 = por %p78, %p79
    %p81 = scmp.ne.s32.totalorder %s72, %s73
    %p82 = scmp.eq.s32.totalorder %s20, 0
    %p83 = por %p81, %p82
    %p84 = scmp.ne.s32.totalorder %s72, %s73
    %p85 = scmp.eq.s32.totalorder %s21, 1
    %p86 = por %p84, %p85
    %p88 = scmp.ne.s32.totalorder %s73, %s87
    %p89 = scmp.eq.s32.totalorder %s21, 0
    %p90 = por %p88, %p89
    %s92 = sadd.s32 %s91, 1
    %p95 = scmp.eq.s32.totalorder %s15, 1
    %p96 = scmp.ne.s32.totalorder %s91, %s93
    %p97 = scmp.eq.s32.totalorder %s15, 0
    %p98 = por %p96, %p97
    %p99 = scmp.ne.s32.totalorder %s91, %s93
    %p100 = scmp.eq.s32.totalorder %s20, 1
    %p101 = por %p99, %p100
    %p102 = scmp.ne.s32.totalorder %s93, %s94
    %p103 = scmp.eq.s32.totalorder %s20, 0
    %p104 = por %p102, %p103
    %p105 = scmp.ne.s32.totalorder %s93, %s94
    %p106 = scmp.eq.s32.totalorder %s21, 1
    %p107 = por %p105, %p106
    %p109 = scmp.ne.s32.totalorder %s94, %s108
    %p110 = scmp.eq.s32.totalorder %s21, 0
    %p111 = por %p109, %p110
    %s113 = sadd.s32 %s112, 1
    %p116 = scmp.eq.s32.totalorder %s15, 1
    %p117 = scmp.ne.s32.totalorder %s112, %s114
    %p118 = scmp.eq.s32.totalorder %s15, 0
    %p119 = por %p117, %p118
    %p120 = scmp.ne.s32.totalorder %s112, %s114
    %p121 = scmp.eq.s32.totalorder %s20, 1
    %p122 = por %p120, %p121
    %p123 = scmp.ne.s32.totalorder %s114, %s115
    %p124 = scmp.eq.s32.totalorder %s20, 0
    %p125 = por %p123, %p124
    %p126 = scmp.ne.s32.totalorder %s114, %s115
    %p127 = scmp.eq.s32.totalorder %s21, 1
    %p128 = por %p126, %p127
    %p130 = scmp.ne.s32.totalorder %s115, %s129
    %p131 = scmp.eq.s32.totalorder %s21, 0
    %p132 = por %p130, %p131
    %s134 = sadd.s32 %s133, 1
    %p137 = scmp.eq.s32.totalorder %s15, 1
    %p138 = scmp.ne.s32.totalorder %s133, %s135
    %p139 = scmp.eq.s32.totalorder %s15, 0
    %p140 = por %p138, %p139
    %p141 = scmp.ne.s32.totalorder %s133, %s135
    %p142 = scmp.eq.s32.totalorder %s20, 1
    %p143 = por %p141, %p142
    %p144 = scmp.ne.s32.totalorder %s135, %s136
    %p145 = scmp.eq.s32.totalorder %s20, 0
    %p146 = por %p144, %p145
    %p147 = scmp.ne.s32.totalorder %s135, %s136
    %p148 = scmp.eq.s32.totalorder %s21, 1
    %p149 = por %p147, %p148
    %p151 = scmp.ne.s32.totalorder %s136, %s150
    %p152 = scmp.eq.s32.totalorder %s21, 0
    %p153 = por %p151, %p152
    %s155 = sadd.s32 %s154, 1
    %p158 = scmp.eq.s32.totalorder %s15, 1
    %p159 = scmp.ne.s32.totalorder %s154, %s156
    %p160 = scmp.eq.s32.totalorder %s15, 0
    %p161 = por %p159, %p160
    %p162 = scmp.ne.s32.totalorder %s154, %s156
    %p163 = scmp.eq.s32.totalorder %s20, 1
    %p164 = por %p162, %p163
    %p165 = scmp.ne.s32.totalorder %s156, %s157
    %p166 = scmp.eq.s32.totalorder %s20, 0
    %p167 = por %p165, %p166
    %p168 = scmp.ne.s32.totalorder %s156, %s157
    %p169 = scmp.eq.s32.totalorder %s21, 1
    %p170 = por %p168, %p169
    %p172 = scmp.ne.s32.totalorder %s157, %s171
    %p173 = scmp.eq.s32.totalorder %s21, 0
    %p174 = por %p172, %p173
    %s175 = ssub.s32 %s15, %s22
    %p176 = scmp.eq.s32.totalorder %s175, 0
    %s178 = sadd.s32 %s177, 1
    %s179 = scalar_select %p176, %s177, %s178
    %p182 = pneg %p176
    %p183 = scmp.eq.s32.totalorder %s15, 1
    %p184 = por %p182, %p183
    %p185 = scmp.ne.s32.totalorder %s177, %s180
    %p186 = scmp.eq.s32.totalorder %s15, 0
    %p187 = por %p185, %p186
    %p188 = scmp.ne.s32.totalorder %s177, %s180
    %p189 = scmp.eq.s32.totalorder %s20, 1
    %p190 = por %p188, %p189
    %p191 = scmp.ne.s32.totalorder %s180, %s181
    %p192 = scmp.eq.s32.totalorder %s20, 0
    %p193 = por %p191, %p192
    %p194 = scmp.ne.s32.totalorder %s180, %s181
    %p195 = scmp.eq.s32.totalorder %s21, 1
    %p196 = por %p194, %p195
    %p198 = scmp.ne.s32.totalorder %s181, %s197
    %p199 = scmp.eq.s32.totalorder %s21, 0
    %p200 = por %p198, %p199
    %s201 = ssub.s32 %s15, %s22
    %p202 = scmp.eq.s32.totalorder %s201, 0
    %s204 = sadd.s32 %s203, 1
    %s205 = scalar_select %p202, %s203, %s204
    %p208 = pneg %p202
    %p209 = scmp.eq.s32.totalorder %s15, 1
    %p210 = por %p208, %p209
    %p211 = scmp.ne.s32.totalorder %s203, %s206
    %p212 = scmp.eq.s32.totalorder %s15, 0
    %p213 = por %p211, %p212
    %p214 = scmp.ne.s32.totalorder %s203, %s206
    %p215 = scmp.eq.s32.totalorder %s20, 1
    %p216 = por %p214, %p215
    %p217 = scmp.ne.s32.totalorder %s206, %s207
    %p218 = scmp.eq.s32.totalorder %s20, 0
    %p219 = por %p217, %p218
    %p220 = scmp.ne.s32.totalorder %s206, %s207
    %p221 = scmp.eq.s32.totalorder %s21, 1
    %p222 = por %p220, %p221
    %p224 = scmp.ne.s32.totalorder %s207, %s223
    %p225 = scmp.eq.s32.totalorder %s21, 0
    %p226 = por %p224, %p225
    %p227 = scmp.le.s32.totalorder 1, %s15
    %p228 = scmp.lt.s32.totalorder %s15, 3
    %p229 = pnand %p227, %p228
    %p230 = pneg %p229
    // Predicated region
    $region9: #{tpu_custom_call.1} parent=5 // pred_check
      _
    $region10: #{tpu_custom_call.1} parent=5 // pred_check_branch
      %232 = sbr.rel (%p229) target = $region12
    $region11: #{tpu_custom_call.1} parent=5 // pred_region
      %s233 = ssub.s32 %s15, 1
      // Predicated region
      $region13: #{tpu_custom_call.1} parent=11 // pred_check
        %p234 = pneg %p62
      $region14: #{tpu_custom_call.1} parent=11 // pred_check_branch
        %236 = sbr.rel (%p234) target = $region16
      $region15: #{tpu_custom_call.1} parent=11 // pred_region
        _
      $region16: #{tpu_custom_call.1} parent=11 // pred_fallthru
        _
      // Predicated region
      $region17: #{tpu_custom_call.1} parent=11 // pred_check
        %p237 = pneg %p83
      $region18: #{tpu_custom_call.1} parent=11 // pred_check_branch
        %239 = sbr.rel (%p237) target = $region20
      $region19: #{tpu_custom_call.1} parent=11 // pred_region
        _
      $region20: #{tpu_custom_call.1} parent=11 // pred_fallthru
        _
      // Predicated region
      $region21: #{tpu_custom_call.1} parent=11 // pred_check
        %p240 = pneg %p104
      $region22: #{tpu_custom_call.1} parent=11 // pred_check_branch
        %242 = sbr.rel (%p240) target = $region24
      $region23: #{tpu_custom_call.1} parent=11 // pred_region
        _
      $region24: #{tpu_custom_call.1} parent=11 // pred_fallthru
        _
      // Predicated region
      $region25: #{tpu_custom_call.1} parent=11 // pred_check
        %p243 = pneg %p125
      $region26: #{tpu_custom_call.1} parent=11 // pred_check_branch
        %245 = sbr.rel (%p243) target = $region28
      $region27: #{tpu_custom_call.1} parent=11 // pred_region
        _
      $region28: #{tpu_custom_call.1} parent=11 // pred_fallthru
        _
      // Predicated region
      $region29: #{tpu_custom_call.1} parent=11 // pred_check
        %p246 = pneg %p146
      $region30: #{tpu_custom_call.1} parent=11 // pred_check_branch
        %248 = sbr.rel (%p246) target = $region32
      $region31: #{tpu_custom_call.1} parent=11 // pred_region
        _
      $region32: #{tpu_custom_call.1} parent=11 // pred_fallthru
        _
      // Predicated region
      $region33: #{tpu_custom_call.1} parent=11 // pred_check
        %p249 = pneg %p167
      $region34: #{tpu_custom_call.1} parent=11 // pred_check_branch
        %251 = sbr.rel (%p249) target = $region36
      $region35: #{tpu_custom_call.1} parent=11 // pred_region
        _
      $region36: #{tpu_custom_call.1} parent=11 // pred_fallthru
        _
    $region12: #{tpu_custom_call.1} parent=5 // pred_fallthru
      _
    %p252 = scmp.lt.s32.totalorder %s15, 2
    // Predicated region
    $region37: #{tpu_custom_call.1} parent=5 // pred_check
      %p253 = pneg %p252
    $region38: #{tpu_custom_call.1} parent=5 // pred_check_branch
      %255 = sbr.rel (%p253) target = $region40
    $region39: #{tpu_custom_call.1} parent=5 // pred_region
      // Predicated region
      $region41: #{tpu_custom_call.1} parent=39 // pred_check
        %p256 = pneg %p35
      $region42: #{tpu_custom_call.1} parent=39 // pred_check_branch
        %258 = sbr.rel (%p256) target = $region44
      $region43: #{tpu_custom_call.1} parent=39 // pred_region
        %s259 = smul.u32 16, %s15
        %p260 = scmp.lt.s32.totalorder %s259, 31
        %s261 = scalar_select %p260, %s259, 31
        %s262 = smul.addr %s261, 8
        %s263 = scalar_lea.vmem %s0, %s262
        %s264 = smul.u32 16, %s15
      $region44: #{tpu_custom_call.1} parent=39 // pred_fallthru
        _
    $region40: #{tpu_custom_call.1} parent=5 // pred_fallthru
      _
    %p265 = scmp.le.s32.totalorder 1, %s15
    %p266 = scmp.lt.s32.totalorder %s15, 3
    %p267 = pnand %p265, %p266
    %p268 = pneg %p267
    // Predicated region
    $region45: #{tpu_custom_call.1} parent=5 // pred_check
      _
    $region46: #{tpu_custom_call.1} parent=5 // pred_check_branch
      %270 = sbr.rel (%p267) target = $region48
    $region47: #{tpu_custom_call.1} parent=5 // pred_region
      %s271 = ssub.s32 %s15, 1
      %s272 = smul.u32 16, %s20
      %p273 = scmp.lt.s32.totalorder %s272, 31
      %s274 = scalar_select %p273, %s272, 31
      %s275 = smul.addr %s274, 8
      %s276 = scalar_lea.vmem %s0, %s275
      %p277 = pneg %p41
      %p278 = pneg %p38
      %p279 = pneg %p62
      %p280 = pneg %p59
      %p281 = pneg %p83
      %p282 = pneg %p80
      %p283 = pneg %p104
      %p284 = pneg %p101
      %p285 = pneg %p125
      %p286 = pneg %p122
      %p287 = pneg %p146
      %p288 = pneg %p143
      %p289 = pneg %p167
      %p290 = pneg %p164
      %p291 = pneg %p193
      %p292 = pneg %p190
      %s293 = smul.u32 16, %s20
      %p294 = scmp.lt.s32.totalorder %s293, 31
      %s295 = scalar_select %p294, %s293, 31
      %s296 = smul.addr %s295, 8
      %s297 = scalar_lea.vmem %s7, %s296
      %p298 = pneg %p219
      %p299 = pneg %p216
      %s300 = smul.u32 16, %s20
      %p301 = scmp.lt.s32.totalorder %s300, 31
      %s302 = scalar_select %p301, %s300, 31
      %s303 = smul.addr %s302, 8
      %s304 = scalar_lea.vmem %s8, %s303
      %s305 = smul.u32 16, %s20
      %p306 = scmp.lt.s32.totalorder %s305, 31
      %s307 = scalar_select %p306, %s305, 31
      %s308 = smul.addr %s307, 8
      %s309 = scalar_lea.vmem %s0, %s308
      %s310 = smul.u32 16, %s20
      %s311 = smul.u32 16, %s20
      %p312 = scmp.lt.s32.totalorder %s311, 31
      %s313 = scalar_select %p312, %s311, 31
      %s314 = smul.addr %s313, 8
      %s315 = scalar_lea.vmem %s7, %s314
      %s316 = smul.u32 16, %s20
      %s317 = smul.u32 16, %s20
      %p318 = scmp.lt.s32.totalorder %s317, 31
      %s319 = scalar_select %p318, %s317, 31
      %s320 = smul.addr %s319, 8
      %s321 = scalar_lea.vmem %s8, %s320
      %s322 = smul.u32 16, %s20
      %v324 = vld [vmem:[%s309] sm:$0xff]
      %v325 = vld [vmem:[%s309 + $0x8] sm:$0xff]
      %v326 = vld [vmem:[%s309 + $0x10] sm:$0xff]
      %v327 = vld [vmem:[%s309 + $0x18] sm:$0xff]
      %v328 = vld [vmem:[%s309 + $0x20] sm:$0xff]
      %v329 = vld [vmem:[%s309 + $0x28] sm:$0xff]
      %v330 = vld [vmem:[%s309 + $0x30] sm:$0xff]
      %v331 = vld [vmem:[%s309 + $0x38] sm:$0xff]
      %v332 = vld [vmem:[%s309 + $0x40] sm:$0xff]
      %v333 = vld [vmem:[%s309 + $0x48] sm:$0xff]
      %v334 = vld [vmem:[%s309 + $0x50] sm:$0xff]
      %v335 = vld [vmem:[%s309 + $0x58] sm:$0xff]
      %v336 = vld [vmem:[%s309 + $0x60] sm:$0xff]
      %v337 = vld [vmem:[%s309 + $0x68] sm:$0xff]
      %v338 = vld [vmem:[%s309 + $0x70] sm:$0xff]
      %v339 = vld [vmem:[%s309 + $0x78] sm:$0xff]
      %v340 = vpack.c.bf16 %v325, %v324
      %v341 = vpack.c.bf16 %v327, %v326
      %v342 = vpack.c.bf16 %v329, %v328
      %v343 = vpack.c.bf16 %v331, %v330
      %v344 = vpack.c.bf16 %v333, %v332
      %v345 = vpack.c.bf16 %v335, %v334
      %v346 = vpack.c.bf16 %v337, %v336
      %v347 = vpack.c.bf16 %v339, %v338
      %v348 = vld [vmem:[%s1] sm:$0xff]
      %v349 = vld [vmem:[%s2] sm:$0x3]
      %v351 = vperm.slane %v349, 0
      %v352 = vperm.slane %v349, 1
      %v356 = vunpack.c.l.b16 %v348
      %v357 = vunpack.c.h.b16 %v348
      %v358 = vpack.c.b16 %v356, %v356
      %v359 = vpack.c.b16 %v357, %v357
      %vm360 = vcmask 64512
      %v362 = vsel %vm360, %v340, 0
      %v365 = vsel %vm360, %v341, 0
      %v368 = vsel %vm360, %v342, 0
      %v371 = vsel %vm360, %v343, 0
      %v374 = vsel %vm360, %v344, 0
      %v377 = vsel %vm360, %v345, 0
      %v380 = vsel %vm360, %v346, 0
      %v383 = vsel %vm360, %v347, 0
      %vm385 = vcmask 1043456
      %v387 = vsel %vm385, %v358, 0
      %v390 = vsel %vm385, %v359, 0
      %392 = vmatpush.bf16.msra.mxu0 0
      %393 = vmatpush.bf16.msra.mxu0 0
      %394 = vmatpush.bf16.msra.mxu0 0
      %395 = vmatpush.bf16.msra.mxu0 0
      %396 = vmatpush.bf16.msra.mxu0 0
      %397 = vmatpush.bf16.msra.mxu0 0
      %398 = vmatpush.bf16.msra.mxu0 0
      %399 = vmatpush.bf16.msra.mxu0 %v387
      %400 = vmatmul.bf16.gmra.mxu0 %v362
      %v401 = vpop.f32.mrf.mxu0
      %v402 = vadd.f32 %v351, %v401
      %v403 = vpop.f32.mrf.mxu0
      %v404 = vadd.f32 %v351, %v403
      %405 = vmatmul.bf16.gmra.mxu0 %v365
      %v406 = vpop.f32.mrf.mxu0
      %v407 = vadd.f32 %v351, %v406
      %v408 = vpop.f32.mrf.mxu0
      %v409 = vadd.f32 %v351, %v408
      %410 = vmatmul.bf16.gmra.mxu0 %v368
      %v411 = vpop.f32.mrf.mxu0
      %v412 = vadd.f32 %v351, %v411
      %v413 = vpop.f32.mrf.mxu0
      %v414 = vadd.f32 %v351, %v413
      %415 = vmatmul.bf16.gmra.mxu0 %v371
      %v416 = vpop.f32.mrf.mxu0
      %v417 = vadd.f32 %v351, %v416
      %v418 = vpop.f32.mrf.mxu0
      %v419 = vadd.f32 %v351, %v418
      %420 = vmatmul.bf16.gmra.mxu0 %v374
      %v421 = vpop.f32.mrf.mxu0
      %v422 = vadd.f32 %v351, %v421
      %v423 = vpop.f32.mrf.mxu0
      %v424 = vadd.f32 %v351, %v423
      %425 = vmatmul.bf16.gmra.mxu0 %v377
      %v426 = vpop.f32.mrf.mxu0
      %v427 = vadd.f32 %v351, %v426
      %v428 = vpop.f32.mrf.mxu0
      %v429 = vadd.f32 %v351, %v428
      %430 = vmatmul.bf16.gmra.mxu0 %v380
      %v431 = vpop.f32.mrf.mxu0
      %v432 = vadd.f32 %v351, %v431
      %v433 = vpop.f32.mrf.mxu0
      %v434 = vadd.f32 %v351, %v433
      %435 = vmatmul.bf16.gmra.mxu0 %v383
      %v436 = vpop.f32.mrf.mxu0
      %v437 = vadd.f32 %v351, %v436
      %v438 = vpop.f32.mrf.mxu0
      %v439 = vadd.f32 %v351, %v438
      %440 = vdwg.mxu0
      %441 = vmatpush.bf16.msra.mxu0 0
      %442 = vmatpush.bf16.msra.mxu0 0
      %443 = vmatpush.bf16.msra.mxu0 0
      %444 = vmatpush.bf16.msra.mxu0 0
      %445 = vmatpush.bf16.msra.mxu0 0
      %446 = vmatpush.bf16.msra.mxu0 0
      %447 = vmatpush.bf16.msra.mxu0 0
      %448 = vmatpush.bf16.msra.mxu0 %v390
      %449 = vmatmul.bf16.gmra.mxu0 %v362
      %v450 = vpop.f32.mrf.mxu0
      %v451 = vadd.f32 %v352, %v450
      %v452 = vpop.f32.mrf.mxu0
      %v453 = vadd.f32 %v352, %v452
      %454 = vmatmul.bf16.gmra.mxu0 %v365
      %v455 = vpop.f32.mrf.mxu0
      %v456 = vadd.f32 %v352, %v455
      %v457 = vpop.f32.mrf.mxu0
      %v458 = vadd.f32 %v352, %v457
      %459 = vmatmul.bf16.gmra.mxu0 %v368
      %v460 = vpop.f32.mrf.mxu0
      %v461 = vadd.f32 %v352, %v460
      %v462 = vpop.f32.mrf.mxu0
      %v463 = vadd.f32 %v352, %v462
      %464 = vmatmul.bf16.gmra.mxu0 %v371
      %v465 = vpop.f32.mrf.mxu0
      %v466 = vadd.f32 %v352, %v465
      %v467 = vpop.f32.mrf.mxu0
      %v468 = vadd.f32 %v352, %v467
      %469 = vmatmul.bf16.gmra.mxu0 %v374
      %v470 = vpop.f32.mrf.mxu0
      %v471 = vadd.f32 %v352, %v470
      %v472 = vpop.f32.mrf.mxu0
      %v473 = vadd.f32 %v352, %v472
      %474 = vmatmul.bf16.gmra.mxu0 %v377
      %v475 = vpop.f32.mrf.mxu0
      %v476 = vadd.f32 %v352, %v475
      %v477 = vpop.f32.mrf.mxu0
      %v478 = vadd.f32 %v352, %v477
      %479 = vmatmul.bf16.gmra.mxu0 %v380
      %v480 = vpop.f32.mrf.mxu0
      %v481 = vadd.f32 %v352, %v480
      %v482 = vpop.f32.mrf.mxu0
      %v483 = vadd.f32 %v352, %v482
      %484 = vmatmul.bf16.gmra.mxu0 %v383
      %v485 = vpop.f32.mrf.mxu0
      %v486 = vadd.f32 %v352, %v485
      %v487 = vpop.f32.mrf.mxu0
      %v488 = vadd.f32 %v352, %v487
      %489 = vdwg.mxu0
      %v490 = vmax.f32 %v402, 0.0
      %v491 = vmax.f32 %v451, 0.0
      %v492 = vmax.f32 %v404, 0.0
      %v493 = vmax.f32 %v453, 0.0
      %v494 = vmax.f32 %v407, 0.0
      %v495 = vmax.f32 %v456, 0.0
      %v496 = vmax.f32 %v409, 0.0
      %v497 = vmax.f32 %v458, 0.0
      %v498 = vmax.f32 %v412, 0.0
      %v499 = vmax.f32 %v461, 0.0
      %v500 = vmax.f32 %v414, 0.0
      %v501 = vmax.f32 %v463, 0.0
      %v502 = vmax.f32 %v417, 0.0
      %v503 = vmax.f32 %v466, 0.0
      %v504 = vmax.f32 %v419, 0.0
      %v505 = vmax.f32 %v468, 0.0
      %v506 = vmax.f32 %v422, 0.0
      %v507 = vmax.f32 %v471, 0.0
      %v508 = vmax.f32 %v424, 0.0
      %v509 = vmax.f32 %v473, 0.0
      %v510 = vmax.f32 %v427, 0.0
      %v511 = vmax.f32 %v476, 0.0
      %v512 = vmax.f32 %v429, 0.0
      %v513 = vmax.f32 %v478, 0.0
      %v514 = vmax.f32 %v432, 0.0
      %v515 = vmax.f32 %v481, 0.0
      %v516 = vmax.f32 %v434, 0.0
      %v517 = vmax.f32 %v483, 0.0
      %v518 = vmax.f32 %v437, 0.0
      %v519 = vmax.f32 %v486, 0.0
      %v520 = vmax.f32 %v439, 0.0
      %v521 = vmax.f32 %v488, 0.0
      %v522 = vpack.c.bf16 %v492, %v490
      %v523 = vpack.c.bf16 %v493, %v491
      %v524 = vpack.c.bf16 %v496, %v494
      %v525 = vpack.c.bf16 %v497, %v495
      %v526 = vpack.c.bf16 %v500, %v498
      %v527 = vpack.c.bf16 %v501, %v499
      %v528 = vpack.c.bf16 %v504, %v502
      %v529 = vpack.c.bf16 %v505, %v503
      %v530 = vpack.c.bf16 %v508, %v506
      %v531 = vpack.c.bf16 %v509, %v507
      %v532 = vpack.c.bf16 %v512, %v510
      %v533 = vpack.c.bf16 %v513, %v511
      %v534 = vpack.c.bf16 %v516, %v514
      %v535 = vpack.c.bf16 %v517, %v515
      %v536 = vpack.c.bf16 %v520, %v518
      %v537 = vpack.c.bf16 %v521, %v519
      %v538 = vld [vmem:[%s3] sm:$0xf]
      %v539 = vld [vmem:[%s3 + $0x4] sm:$0xf]
      %v540 = vld [vmem:[%s3 + $0x8] sm:$0xf]
      %v541 = vld [vmem:[%s3 + $0xc] sm:$0xf]
      %v542 = vld [vmem:[%s3 + $0x10] sm:$0xf]
      %v543 = vld [vmem:[%s3 + $0x14] sm:$0xf]
      %v544 = vld [vmem:[%s3 + $0x18] sm:$0xf]
      %v545 = vld [vmem:[%s3 + $0x1c] sm:$0xf]
      %v546 = vld [vmem:[%s3 + $0x20] sm:$0xf]
      %v547 = vld [vmem:[%s3 + $0x24] sm:$0xf]
      %v548 = vld [vmem:[%s3 + $0x28] sm:$0xf]
      %v549 = vld [vmem:[%s3 + $0x2c] sm:$0xf]
      %v550 = vld [vmem:[%s3 + $0x30] sm:$0xf]
      %v551 = vld [vmem:[%s3 + $0x34] sm:$0xf]
      %v552 = vld [vmem:[%s3 + $0x38] sm:$0xf]
      %v553 = vld [vmem:[%s3 + $0x3c] sm:$0xf]
      %v554 = vld [vmem:[%s3 + $0x40] sm:$0xf]
      %v555 = vld [vmem:[%s3 + $0x44] sm:$0xf]
      %v556 = vld [vmem:[%s3 + $0x48] sm:$0xf]
      %v557 = vld [vmem:[%s3 + $0x4c] sm:$0xf]
      %v558 = vld [vmem:[%s3 + $0x50] sm:$0xf]
      %v559 = vld [vmem:[%s3 + $0x54] sm:$0xf]
      %v560 = vld [vmem:[%s3 + $0x58] sm:$0xf]
      %v561 = vld [vmem:[%s3 + $0x5c] sm:$0xf]
      %v562 = vld [vmem:[%s3 + $0x60] sm:$0xf]
      %v563 = vld [vmem:[%s3 + $0x64] sm:$0xf]
      %v564 = vld [vmem:[%s3 + $0x68] sm:$0xf]
      %v565 = vld [vmem:[%s3 + $0x6c] sm:$0xf]
      %v566 = vld [vmem:[%s3 + $0x70] sm:$0xf]
      %v567 = vld [vmem:[%s3 + $0x74] sm:$0xf]
      %v568 = vld [vmem:[%s3 + $0x78] sm:$0xf]
      %v569 = vld [vmem:[%s3 + $0x7c] sm:$0xf]
      %v570 = vld [vmem:[%s4] sm:$0x1]
      %v572 = vperm.slane %v570, 0
      %v606 = vunpack.c.l.b16 %v538
      %v607 = vunpack.c.l.b16 %v539
      %v608 = vunpack.c.l.b16 %v540
      %v609 = vunpack.c.l.b16 %v541
      %v610 = vunpack.c.l.b16 %v542
      %v611 = vunpack.c.l.b16 %v543
      %v612 = vunpack.c.l.b16 %v544
      %v613 = vunpack.c.l.b16 %v545
      %v614 = vunpack.c.l.b16 %v546
      %v615 = vunpack.c.l.b16 %v547
      %v616 = vunpack.c.l.b16 %v548
      %v617 = vunpack.c.l.b16 %v549
      %v618 = vunpack.c.l.b16 %v550
      %v619 = vunpack.c.l.b16 %v551
      %v620 = vunpack.c.l.b16 %v552
      %v621 = vunpack.c.l.b16 %v553
      %v622 = vunpack.c.l.b16 %v554
      %v623 = vunpack.c.l.b16 %v555
      %v624 = vunpack.c.l.b16 %v556
      %v625 = vunpack.c.l.b16 %v557
      %v626 = vunpack.c.l.b16 %v558
      %v627 = vunpack.c.l.b16 %v559
      %v628 = vunpack.c.l.b16 %v560
      %v629 = vunpack.c.l.b16 %v561
      %v630 = vunpack.c.l.b16 %v562
      %v631 = vunpack.c.l.b16 %v563
      %v632 = vunpack.c.l.b16 %v564
      %v633 = vunpack.c.l.b16 %v565
      %v634 = vunpack.c.l.b16 %v566
      %v635 = vunpack.c.l.b16 %v567
      %v636 = vunpack.c.l.b16 %v568
      %v637 = vunpack.c.l.b16 %v569
      %v638 = vpack.c.b16 %v607, %v606
      %v639 = vpack.c.b16 %v609, %v608
      %v640 = vpack.c.b16 %v611, %v610
      %v641 = vpack.c.b16 %v613, %v612
      %v642 = vpack.c.b16 %v615, %v614
      %v643 = vpack.c.b16 %v617, %v616
      %v644 = vpack.c.b16 %v619, %v618
      %v645 = vpack.c.b16 %v621, %v620
      %v646 = vpack.c.b16 %v623, %v622
      %v647 = vpack.c.b16 %v625, %v624
      %v648 = vpack.c.b16 %v627, %v626
      %v649 = vpack.c.b16 %v629, %v628
      %v650 = vpack.c.b16 %v631, %v630
      %v651 = vpack.c.b16 %v633, %v632
      %v652 = vpack.c.b16 %v635, %v634
      %v653 = vpack.c.b16 %v637, %v636
      %670 = vmatpush.bf16.msra.mxu0 %v645
      %671 = vmatpush.bf16.msra.mxu0 %v644
      %672 = vmatpush.bf16.msra.mxu0 %v643
      %673 = vmatpush.bf16.msra.mxu0 %v642
      %674 = vmatpush.bf16.msra.mxu0 %v641
      %675 = vmatpush.bf16.msra.mxu0 %v640
      %676 = vmatpush.bf16.msra.mxu0 %v639
      %677 = vmatpush.bf16.msra.mxu0 %v638
      %678 = vmatmul.bf16.gmra.mxu0 %v522
      %v679 = vpop.f32.mrf.mxu0
      %v680 = vadd.f32 %v572, %v679
      %v681 = vpop.f32.mrf.mxu0
      %v682 = vadd.f32 %v572, %v681
      %683 = vmatmul.bf16.gmra.mxu0 %v524
      %v684 = vpop.f32.mrf.mxu0
      %v685 = vadd.f32 %v572, %v684
      %v686 = vpop.f32.mrf.mxu0
      %v687 = vadd.f32 %v572, %v686
      %688 = vmatmul.bf16.gmra.mxu0 %v526
      %v689 = vpop.f32.mrf.mxu0
      %v690 = vadd.f32 %v572, %v689
      %v691 = vpop.f32.mrf.mxu0
      %v692 = vadd.f32 %v572, %v691
      %693 = vmatmul.bf16.gmra.mxu0 %v528
      %v694 = vpop.f32.mrf.mxu0
      %v695 = vadd.f32 %v572, %v694
      %v696 = vpop.f32.mrf.mxu0
      %v697 = vadd.f32 %v572, %v696
      %698 = vmatmul.bf16.gmra.mxu0 %v530
      %v699 = vpop.f32.mrf.mxu0
      %v700 = vadd.f32 %v572, %v699
      %v701 = vpop.f32.mrf.mxu0
      %v702 = vadd.f32 %v572, %v701
      %703 = vmatmul.bf16.gmra.mxu0 %v532
      %v704 = vpop.f32.mrf.mxu0
      %v705 = vadd.f32 %v572, %v704
      %v706 = vpop.f32.mrf.mxu0
      %v707 = vadd.f32 %v572, %v706
      %708 = vmatmul.bf16.gmra.mxu0 %v534
      %v709 = vpop.f32.mrf.mxu0
      %v710 = vadd.f32 %v572, %v709
      %v711 = vpop.f32.mrf.mxu0
      %v712 = vadd.f32 %v572, %v711
      %713 = vmatmul.bf16.gmra.mxu0 %v536
      %v714 = vpop.f32.mrf.mxu0
      %v715 = vadd.f32 %v572, %v714
      %v716 = vpop.f32.mrf.mxu0
      %v717 = vadd.f32 %v572, %v716
      %718 = vdwg.mxu0
      %719 = vmatpush.bf16.msra.mxu0 %v653
      %720 = vmatpush.bf16.msra.mxu0 %v652
      %721 = vmatpush.bf16.msra.mxu0 %v651
      %722 = vmatpush.bf16.msra.mxu0 %v650
      %723 = vmatpush.bf16.msra.mxu0 %v649
      %724 = vmatpush.bf16.msra.mxu0 %v648
      %725 = vmatpush.bf16.msra.mxu0 %v647
      %726 = vmatpush.bf16.msra.mxu0 %v646
      %727 = vmatmul.bf16.gmra.mxu0 %v523
      %v728 = vpop.f32.mrf.mxu0
      %v729 = vadd.f32 %v680, %v728
      %v730 = vpop.f32.mrf.mxu0
      %v731 = vadd.f32 %v682, %v730
      %732 = vmatmul.bf16.gmra.mxu0 %v525
      %v733 = vpop.f32.mrf.mxu0
      %v734 = vadd.f32 %v685, %v733
      %v735 = vpop.f32.mrf.mxu0
      %v736 = vadd.f32 %v687, %v735
      %737 = vmatmul.bf16.gmra.mxu0 %v527
      %v738 = vpop.f32.mrf.mxu0
      %v739 = vadd.f32 %v690, %v738
      %v740 = vpop.f32.mrf.mxu0
      %v741 = vadd.f32 %v692, %v740
      %742 = vmatmul.bf16.gmra.mxu0 %v529
      %v743 = vpop.f32.mrf.mxu0
      %v744 = vadd.f32 %v695, %v743
      %v745 = vpop.f32.mrf.mxu0
      %v746 = vadd.f32 %v697, %v745
      %747 = vmatmul.bf16.gmra.mxu0 %v531
      %v748 = vpop.f32.mrf.mxu0
      %v749 = vadd.f32 %v700, %v748
      %v750 = vpop.f32.mrf.mxu0
      %v751 = vadd.f32 %v702, %v750
      %752 = vmatmul.bf16.gmra.mxu0 %v533
      %v753 = vpop.f32.mrf.mxu0
      %v754 = vadd.f32 %v705, %v753
      %v755 = vpop.f32.mrf.mxu0
      %v756 = vadd.f32 %v707, %v755
      %757 = vmatmul.bf16.gmra.mxu0 %v535
      %v758 = vpop.f32.mrf.mxu0
      %v759 = vadd.f32 %v710, %v758
      %v760 = vpop.f32.mrf.mxu0
      %v761 = vadd.f32 %v712, %v760
      %762 = vmatmul.bf16.gmra.mxu0 %v537
      %v763 = vpop.f32.mrf.mxu0
      %v764 = vadd.f32 %v715, %v763
      %v765 = vpop.f32.mrf.mxu0
      %v766 = vadd.f32 %v717, %v765
      %767 = vdwg.mxu0
      %v768 = vmax.f32 %v729, 0.0
      %v769 = vmax.f32 %v731, 0.0
      %v770 = vmax.f32 %v734, 0.0
      %v771 = vmax.f32 %v736, 0.0
      %v772 = vmax.f32 %v739, 0.0
      %v773 = vmax.f32 %v741, 0.0
      %v774 = vmax.f32 %v744, 0.0
      %v775 = vmax.f32 %v746, 0.0
      %v776 = vmax.f32 %v749, 0.0
      %v777 = vmax.f32 %v751, 0.0
      %v778 = vmax.f32 %v754, 0.0
      %v779 = vmax.f32 %v756, 0.0
      %v780 = vmax.f32 %v759, 0.0
      %v781 = vmax.f32 %v761, 0.0
      %v782 = vmax.f32 %v764, 0.0
      %v783 = vmax.f32 %v766, 0.0
      %v784 = vpack.c.bf16 %v769, %v768
      %v785 = vpack.c.bf16 %v771, %v770
      %v786 = vpack.c.bf16 %v773, %v772
      %v787 = vpack.c.bf16 %v775, %v774
      %v788 = vpack.c.bf16 %v777, %v776
      %v789 = vpack.c.bf16 %v779, %v778
      %v790 = vpack.c.bf16 %v781, %v780
      %v791 = vpack.c.bf16 %v783, %v782
      %v792 = vld [vmem:[%s5] sm:$0xf]
      %v793 = vld [vmem:[%s5 + $0x4] sm:$0xf]
      %v794 = vld [vmem:[%s5 + $0x8] sm:$0xf]
      %v795 = vld [vmem:[%s5 + $0xc] sm:$0xf]
      %v796 = vld [vmem:[%s5 + $0x10] sm:$0xf]
      %v797 = vld [vmem:[%s5 + $0x14] sm:$0xf]
      %v798 = vld [vmem:[%s5 + $0x18] sm:$0xf]
      %v799 = vld [vmem:[%s5 + $0x1c] sm:$0xf]
      %v800 = vld [vmem:[%s5 + $0x20] sm:$0xf]
      %v801 = vld [vmem:[%s5 + $0x24] sm:$0xf]
      %v802 = vld [vmem:[%s5 + $0x28] sm:$0xf]
      %v803 = vld [vmem:[%s5 + $0x2c] sm:$0xf]
      %v804 = vld [vmem:[%s5 + $0x30] sm:$0xf]
      %v805 = vld [vmem:[%s5 + $0x34] sm:$0xf]
      %v806 = vld [vmem:[%s5 + $0x38] sm:$0xf]
      %v807 = vld [vmem:[%s5 + $0x3c] sm:$0xf]
      %v808 = vld [vmem:[%s6] sm:$0x1]
      %v810 = vperm.slane %v808, 0
      %v828 = vunpack.c.l.b16 %v792
      %v829 = vunpack.c.l.b16 %v793
      %v830 = vunpack.c.l.b16 %v794
      %v831 = vunpack.c.l.b16 %v795
      %v832 = vunpack.c.l.b16 %v796
      %v833 = vunpack.c.l.b16 %v797
      %v834 = vunpack.c.l.b16 %v798
      %v835 = vunpack.c.l.b16 %v799
      %v836 = vunpack.c.l.b16 %v800
      %v837 = vunpack.c.l.b16 %v801
      %v838 = vunpack.c.l.b16 %v802
      %v839 = vunpack.c.l.b16 %v803
      %v840 = vunpack.c.l.b16 %v804
      %v841 = vunpack.c.l.b16 %v805
      %v842 = vunpack.c.l.b16 %v806
      %v843 = vunpack.c.l.b16 %v807
      %v844 = vpack.c.b16 %v829, %v828
      %v845 = vpack.c.b16 %v831, %v830
      %v846 = vpack.c.b16 %v833, %v832
      %v847 = vpack.c.b16 %v835, %v834
      %v848 = vpack.c.b16 %v837, %v836
      %v849 = vpack.c.b16 %v839, %v838
      %v850 = vpack.c.b16 %v841, %v840
      %v851 = vpack.c.b16 %v843, %v842
      %860 = vmatpush.bf16.msra.mxu0 %v851
      %861 = vmatpush.bf16.msra.mxu0 %v850
      %862 = vmatpush.bf16.msra.mxu0 %v849
      %863 = vmatpush.bf16.msra.mxu0 %v848
      %864 = vmatpush.bf16.msra.mxu0 %v847
      %865 = vmatpush.bf16.msra.mxu0 %v846
      %866 = vmatpush.bf16.msra.mxu0 %v845
      %867 = vmatpush.bf16.msra.mxu0 %v844
      %868 = vmatmul.bf16.gmra.mxu0 %v784
      %v869 = vpop.f32.mrf.mxu0
      %v870 = vadd.f32 %v810, %v869
      %v871 = vpop.f32.mrf.mxu0
      %v872 = vadd.f32 %v810, %v871
      %873 = vmatmul.bf16.gmra.mxu0 %v785
      %v874 = vpop.f32.mrf.mxu0
      %v875 = vadd.f32 %v810, %v874
      %v876 = vpop.f32.mrf.mxu0
      %v877 = vadd.f32 %v810, %v876
      %878 = vmatmul.bf16.gmra.mxu0 %v786
      %v879 = vpop.f32.mrf.mxu0
      %v880 = vadd.f32 %v810, %v879
      %v881 = vpop.f32.mrf.mxu0
      %v882 = vadd.f32 %v810, %v881
      %883 = vmatmul.bf16.gmra.mxu0 %v787
      %v884 = vpop.f32.mrf.mxu0
      %v885 = vadd.f32 %v810, %v884
      %v886 = vpop.f32.mrf.mxu0
      %v887 = vadd.f32 %v810, %v886
      %888 = vmatmul.bf16.gmra.mxu0 %v788
      %v889 = vpop.f32.mrf.mxu0
      %v890 = vadd.f32 %v810, %v889
      %v891 = vpop.f32.mrf.mxu0
      %v892 = vadd.f32 %v810, %v891
      %893 = vmatmul.bf16.gmra.mxu0 %v789
      %v894 = vpop.f32.mrf.mxu0
      %v895 = vadd.f32 %v810, %v894
      %v896 = vpop.f32.mrf.mxu0
      %v897 = vadd.f32 %v810, %v896
      %898 = vmatmul.bf16.gmra.mxu0 %v790
      %v899 = vpop.f32.mrf.mxu0
      %v900 = vadd.f32 %v810, %v899
      %v901 = vpop.f32.mrf.mxu0
      %v902 = vadd.f32 %v810, %v901
      %903 = vmatmul.bf16.gmra.mxu0 %v791
      %v904 = vpop.f32.mrf.mxu0
      %v905 = vadd.f32 %v810, %v904
      %v906 = vpop.f32.mrf.mxu0
      %v907 = vadd.f32 %v810, %v906
      %908 = vdwg.mxu0
      %vm909 = vcmask 31744
      %v910 = vsel %vm909, %v870, -inf
      %911 = vmax.xlane.f32.xlu0 %v910
      %v912 = vpop.xlane.xlu0 %911
      %v913 = vsel %vm909, %v872, -inf
      %914 = vmax.xlane.f32.xlu0 %v913
      %v915 = vpop.xlane.xlu0 %914
      %v916 = vsel %vm909, %v875, -inf
      %917 = vmax.xlane.f32.xlu0 %v916
      %v918 = vpop.xlane.xlu0 %917
      %v919 = vsel %vm909, %v877, -inf
      %920 = vmax.xlane.f32.xlu0 %v919
      %v921 = vpop.xlane.xlu0 %920
      %v922 = vsel %vm909, %v880, -inf
      %923 = vmax.xlane.f32.xlu0 %v922
      %v924 = vpop.xlane.xlu0 %923
      %v925 = vsel %vm909, %v882, -inf
      %926 = vmax.xlane.f32.xlu0 %v925
      %v927 = vpop.xlane.xlu0 %926
      %v928 = vsel %vm909, %v885, -inf
      %929 = vmax.xlane.f32.xlu0 %v928
      %v930 = vpop.xlane.xlu0 %929
      %v931 = vsel %vm909, %v887, -inf
      %932 = vmax.xlane.f32.xlu0 %v931
      %v933 = vpop.xlane.xlu0 %932
      %v934 = vsel %vm909, %v890, -inf
      %935 = vmax.xlane.f32.xlu0 %v934
      %v936 = vpop.xlane.xlu0 %935
      %v937 = vsel %vm909, %v892, -inf
      %938 = vmax.xlane.f32.xlu0 %v937
      %v939 = vpop.xlane.xlu0 %938
      %v940 = vsel %vm909, %v895, -inf
      %941 = vmax.xlane.f32.xlu0 %v940
      %v942 = vpop.xlane.xlu0 %941
      %v943 = vsel %vm909, %v897, -inf
      %944 = vmax.xlane.f32.xlu0 %v943
      %v945 = vpop.xlane.xlu0 %944
      %v946 = vsel %vm909, %v900, -inf
      %947 = vmax.xlane.f32.xlu0 %v946
      %v948 = vpop.xlane.xlu0 %947
      %v949 = vsel %vm909, %v902, -inf
      %950 = vmax.xlane.f32.xlu0 %v949
      %v951 = vpop.xlane.xlu0 %950
      %v952 = vsel %vm909, %v905, -inf
      %953 = vmax.xlane.f32.xlu0 %v952
      %v954 = vpop.xlane.xlu0 %953
      %v955 = vsel %vm909, %v907, -inf
      %956 = vmax.xlane.f32.xlu0 %v955
      %v957 = vpop.xlane.xlu0 %956
      %v958 = vlaneseq
      %v959 = vand.u32 %v958, 127
      %vm960 = vcmp.eq.f32.partialorder %v870, %v912
      %vm961 = vcmp.eq.f32.partialorder %v872, %v915
      %vm962 = vcmp.eq.f32.partialorder %v875, %v918
      %vm963 = vcmp.eq.f32.partialorder %v877, %v921
      %vm964 = vcmp.eq.f32.partialorder %v880, %v924
      %vm965 = vcmp.eq.f32.partialorder %v882, %v927
      %vm966 = vcmp.eq.f32.partialorder %v885, %v930
      %vm967 = vcmp.eq.f32.partialorder %v887, %v933
      %vm968 = vcmp.eq.f32.partialorder %v890, %v936
      %vm969 = vcmp.eq.f32.partialorder %v892, %v939
      %vm970 = vcmp.eq.f32.partialorder %v895, %v942
      %vm971 = vcmp.eq.f32.partialorder %v897, %v945
      %vm972 = vcmp.eq.f32.partialorder %v900, %v948
      %vm973 = vcmp.eq.f32.partialorder %v902, %v951
      %vm974 = vcmp.eq.f32.partialorder %v905, %v954
      %vm975 = vcmp.eq.f32.partialorder %v907, %v957
      %v976 = vsel %vm960, %v959, 4
      %v977 = vsel %vm961, %v959, 4
      %v978 = vsel %vm962, %v959, 4
      %v979 = vsel %vm963, %v959, 4
      %v980 = vsel %vm964, %v959, 4
      %v981 = vsel %vm965, %v959, 4
      %v982 = vsel %vm966, %v959, 4
      %v983 = vsel %vm967, %v959, 4
      %v984 = vsel %vm968, %v959, 4
      %v985 = vsel %vm969, %v959, 4
      %v986 = vsel %vm970, %v959, 4
      %v987 = vsel %vm971, %v959, 4
      %v988 = vsel %vm972, %v959, 4
      %v989 = vsel %vm973, %v959, 4
      %v990 = vsel %vm974, %v959, 4
      %v991 = vsel %vm975, %v959, 4
      %v992 = vsel %vm909, %v976, 2147483647
      %v993 = vand.u32 %v992, 65535
      %v994 = vshra.s32 %v992, 16
      %v995 = vcvt.s32.f32 %v993
      %v996 = vcvt.s32.f32 %v994
      %997 = vmin.xlane.f32.xlu0 %v996
      %v998 = vpop.xlane.xlu0 %997
      %vm999 = vcmp.eq.f32.partialorder %v996, %v998
      %v1000 = vsel %vm999, %v995, inf
      %1001 = vmin.xlane.f32.xlu0 %v1000
      %v1002 = vpop.xlane.xlu0 %1001
      %v1003 = vcvt.f32.s32 %v1002
      %v1004 = vcvt.f32.s32 %v998
      %v1005 = vshll.u32 %v1004, 16
      %v1006 = vadd.s32 %v1005, %v1003
      %v1007 = vsel %vm909, %v977, 2147483647
      %v1008 = vand.u32 %v1007, 65535
      %v1009 = vshra.s32 %v1007, 16
      %v1010 = vcvt.s32.f32 %v1008
      %v1011 = vcvt.s32.f32 %v1009
      %1012 = vmin.xlane.f32.xlu0 %v1011
      %v1013 = vpop.xlane.xlu0 %1012
      %vm1014 = vcmp.eq.f32.partialorder %v1011, %v1013
      %v1015 = vsel %vm1014, %v1010, inf
      %1016 = vmin.xlane.f32.xlu0 %v1015
      %v1017 = vpop.xlane.xlu0 %1016
      %v1018 = vcvt.f32.s32 %v1017
      %v1019 = vcvt.f32.s32 %v1013
      %v1020 = vshll.u32 %v1019, 16
      %v1021 = vadd.s32 %v1020, %v1018
      %v1022 = vsel %vm909, %v978, 2147483647
      %v1023 = vand.u32 %v1022, 65535
      %v1024 = vshra.s32 %v1022, 16
      %v1025 = vcvt.s32.f32 %v1023
      %v1026 = vcvt.s32.f32 %v1024
      %1027 = vmin.xlane.f32.xlu0 %v1026
      %v1028 = vpop.xlane.xlu0 %1027
      %vm1029 = vcmp.eq.f32.partialorder %v1026, %v1028
      %v1030 = vsel %vm1029, %v1025, inf
      %1031 = vmin.xlane.f32.xlu0 %v1030
      %v1032 = vpop.xlane.xlu0 %1031
      %v1033 = vcvt.f32.s32 %v1032
      %v1034 = vcvt.f32.s32 %v1028
      %v1035 = vshll.u32 %v1034, 16
      %v1036 = vadd.s32 %v1035, %v1033
      %v1037 = vsel %vm909, %v979, 2147483647
      %v1038 = vand.u32 %v1037, 65535
      %v1039 = vshra.s32 %v1037, 16
      %v1040 = vcvt.s32.f32 %v1038
      %v1041 = vcvt.s32.f32 %v1039
      %1042 = vmin.xlane.f32.xlu0 %v1041
      %v1043 = vpop.xlane.xlu0 %1042
      %vm1044 = vcmp.eq.f32.partialorder %v1041, %v1043
      %v1045 = vsel %vm1044, %v1040, inf
      %1046 = vmin.xlane.f32.xlu0 %v1045
      %v1047 = vpop.xlane.xlu0 %1046
      %v1048 = vcvt.f32.s32 %v1047
      %v1049 = vcvt.f32.s32 %v1043
      %v1050 = vshll.u32 %v1049, 16
      %v1051 = vadd.s32 %v1050, %v1048
      %v1052 = vsel %vm909, %v980, 2147483647
      %v1053 = vand.u32 %v1052, 65535
      %v1054 = vshra.s32 %v1052, 16
      %v1055 = vcvt.s32.f32 %v1053
      %v1056 = vcvt.s32.f32 %v1054
      %1057 = vmin.xlane.f32.xlu0 %v1056
      %v1058 = vpop.xlane.xlu0 %1057
      %vm1059 = vcmp.eq.f32.partialorder %v1056, %v1058
      %v1060 = vsel %vm1059, %v1055, inf
      %1061 = vmin.xlane.f32.xlu0 %v1060
      %v1062 = vpop.xlane.xlu0 %1061
      %v1063 = vcvt.f32.s32 %v1062
      %v1064 = vcvt.f32.s32 %v1058
      %v1065 = vshll.u32 %v1064, 16
      %v1066 = vadd.s32 %v1065, %v1063
      %v1067 = vsel %vm909, %v981, 2147483647
      %v1068 = vand.u32 %v1067, 65535
      %v1069 = vshra.s32 %v1067, 16
      %v1070 = vcvt.s32.f32 %v1068
      %v1071 = vcvt.s32.f32 %v1069
      %1072 = vmin.xlane.f32.xlu0 %v1071
      %v1073 = vpop.xlane.xlu0 %1072
      %vm1074 = vcmp.eq.f32.partialorder %v1071, %v1073
      %v1075 = vsel %vm1074, %v1070, inf
      %1076 = vmin.xlane.f32.xlu0 %v1075
      %v1077 = vpop.xlane.xlu0 %1076
      %v1078 = vcvt.f32.s32 %v1077
      %v1079 = vcvt.f32.s32 %v1073
      %v1080 = vshll.u32 %v1079, 16
      %v1081 = vadd.s32 %v1080, %v1078
      %v1082 = vsel %vm909, %v982, 2147483647
      %v1083 = vand.u32 %v1082, 65535
      %v1084 = vshra.s32 %v1082, 16
      %v1085 = vcvt.s32.f32 %v1083
      %v1086 = vcvt.s32.f32 %v1084
      %1087 = vmin.xlane.f32.xlu0 %v1086
      %v1088 = vpop.xlane.xlu0 %1087
      %vm1089 = vcmp.eq.f32.partialorder %v1086, %v1088
      %v1090 = vsel %vm1089, %v1085, inf
      %1091 = vmin.xlane.f32.xlu0 %v1090
      %v1092 = vpop.xlane.xlu0 %1091
      %v1093 = vcvt.f32.s32 %v1092
      %v1094 = vcvt.f32.s32 %v1088
      %v1095 = vshll.u32 %v1094, 16
      %v1096 = vadd.s32 %v1095, %v1093
      %v1097 = vsel %vm909, %v983, 2147483647
      %v1098 = vand.u32 %v1097, 65535
      %v1099 = vshra.s32 %v1097, 16
      %v1100 = vcvt.s32.f32 %v1098
      %v1101 = vcvt.s32.f32 %v1099
      %1102 = vmin.xlane.f32.xlu0 %v1101
      %v1103 = vpop.xlane.xlu0 %1102
      %vm1104 = vcmp.eq.f32.partialorder %v1101, %v1103
      %v1105 = vsel %vm1104, %v1100, inf
      %1106 = vmin.xlane.f32.xlu0 %v1105
      %v1107 = vpop.xlane.xlu0 %1106
      %v1108 = vcvt.f32.s32 %v1107
      %v1109 = vcvt.f32.s32 %v1103
      %v1110 = vshll.u32 %v1109, 16
      %v1111 = vadd.s32 %v1110, %v1108
      %v1112 = vsel %vm909, %v984, 2147483647
      %v1113 = vand.u32 %v1112, 65535
      %v1114 = vshra.s32 %v1112, 16
      %v1115 = vcvt.s32.f32 %v1113
      %v1116 = vcvt.s32.f32 %v1114
      %1117 = vmin.xlane.f32.xlu0 %v1116
      %v1118 = vpop.xlane.xlu0 %1117
      %vm1119 = vcmp.eq.f32.partialorder %v1116, %v1118
      %v1120 = vsel %vm1119, %v1115, inf
      %1121 = vmin.xlane.f32.xlu0 %v1120
      %v1122 = vpop.xlane.xlu0 %1121
      %v1123 = vcvt.f32.s32 %v1122
      %v1124 = vcvt.f32.s32 %v1118
      %v1125 = vshll.u32 %v1124, 16
      %v1126 = vadd.s32 %v1125, %v1123
      %v1127 = vsel %vm909, %v985, 2147483647
      %v1128 = vand.u32 %v1127, 65535
      %v1129 = vshra.s32 %v1127, 16
      %v1130 = vcvt.s32.f32 %v1128
      %v1131 = vcvt.s32.f32 %v1129
      %1132 = vmin.xlane.f32.xlu0 %v1131
      %v1133 = vpop.xlane.xlu0 %1132
      %vm1134 = vcmp.eq.f32.partialorder %v1131, %v1133
      %v1135 = vsel %vm1134, %v1130, inf
      %1136 = vmin.xlane.f32.xlu0 %v1135
      %v1137 = vpop.xlane.xlu0 %1136
      %v1138 = vcvt.f32.s32 %v1137
      %v1139 = vcvt.f32.s32 %v1133
      %v1140 = vshll.u32 %v1139, 16
      %v1141 = vadd.s32 %v1140, %v1138
      %v1142 = vsel %vm909, %v986, 2147483647
      %v1143 = vand.u32 %v1142, 65535
      %v1144 = vshra.s32 %v1142, 16
      %v1145 = vcvt.s32.f32 %v1143
      %v1146 = vcvt.s32.f32 %v1144
      %1147 = vmin.xlane.f32.xlu0 %v1146
      %v1148 = vpop.xlane.xlu0 %1147
      %vm1149 = vcmp.eq.f32.partialorder %v1146, %v1148
      %v1150 = vsel %vm1149, %v1145, inf
      %1151 = vmin.xlane.f32.xlu0 %v1150
      %v1152 = vpop.xlane.xlu0 %1151
      %v1153 = vcvt.f32.s32 %v1152
      %v1154 = vcvt.f32.s32 %v1148
      %v1155 = vshll.u32 %v1154, 16
      %v1156 = vadd.s32 %v1155, %v1153
      %v1157 = vsel %vm909, %v987, 2147483647
      %v1158 = vand.u32 %v1157, 65535
      %v1159 = vshra.s32 %v1157, 16
      %v1160 = vcvt.s32.f32 %v1158
      %v1161 = vcvt.s32.f32 %v1159
      %1162 = vmin.xlane.f32.xlu0 %v1161
      %v1163 = vpop.xlane.xlu0 %1162
      %vm1164 = vcmp.eq.f32.partialorder %v1161, %v1163
      %v1165 = vsel %vm1164, %v1160, inf
      %1166 = vmin.xlane.f32.xlu0 %v1165
      %v1167 = vpop.xlane.xlu0 %1166
      %v1168 = vcvt.f32.s32 %v1167
      %v1169 = vcvt.f32.s32 %v1163
      %v1170 = vshll.u32 %v1169, 16
      %v1171 = vadd.s32 %v1170, %v1168
      %v1172 = vsel %vm909, %v988, 2147483647
      %v1173 = vand.u32 %v1172, 65535
      %v1174 = vshra.s32 %v1172, 16
      %v1175 = vcvt.s32.f32 %v1173
      %v1176 = vcvt.s32.f32 %v1174
      %1177 = vmin.xlane.f32.xlu0 %v1176
      %v1178 = vpop.xlane.xlu0 %1177
      %vm1179 = vcmp.eq.f32.partialorder %v1176, %v1178
      %v1180 = vsel %vm1179, %v1175, inf
      %1181 = vmin.xlane.f32.xlu0 %v1180
      %v1182 = vpop.xlane.xlu0 %1181
      %v1183 = vcvt.f32.s32 %v1182
      %v1184 = vcvt.f32.s32 %v1178
      %v1185 = vshll.u32 %v1184, 16
      %v1186 = vadd.s32 %v1185, %v1183
      %v1187 = vsel %vm909, %v989, 2147483647
      %v1188 = vand.u32 %v1187, 65535
      %v1189 = vshra.s32 %v1187, 16
      %v1190 = vcvt.s32.f32 %v1188
      %v1191 = vcvt.s32.f32 %v1189
      %1192 = vmin.xlane.f32.xlu0 %v1191
      %v1193 = vpop.xlane.xlu0 %1192
      %vm1194 = vcmp.eq.f32.partialorder %v1191, %v1193
      %v1195 = vsel %vm1194, %v1190, inf
      %1196 = vmin.xlane.f32.xlu0 %v1195
      %v1197 = vpop.xlane.xlu0 %1196
      %v1198 = vcvt.f32.s32 %v1197
      %v1199 = vcvt.f32.s32 %v1193
      %v1200 = vshll.u32 %v1199, 16
      %v1201 = vadd.s32 %v1200, %v1198
      %v1202 = vsel %vm909, %v990, 2147483647
      %v1203 = vand.u32 %v1202, 65535
      %v1204 = vshra.s32 %v1202, 16
      %v1205 = vcvt.s32.f32 %v1203
      %v1206 = vcvt.s32.f32 %v1204
      %1207 = vmin.xlane.f32.xlu0 %v1206
      %v1208 = vpop.xlane.xlu0 %1207
      %vm1209 = vcmp.eq.f32.partialorder %v1206, %v1208
      %v1210 = vsel %vm1209, %v1205, inf
      %1211 = vmin.xlane.f32.xlu0 %v1210
      %v1212 = vpop.xlane.xlu0 %1211
      %v1213 = vcvt.f32.s32 %v1212
      %v1214 = vcvt.f32.s32 %v1208
      %v1215 = vshll.u32 %v1214, 16
      %v1216 = vadd.s32 %v1215, %v1213
      %v1217 = vsel %vm909, %v991, 2147483647
      %v1218 = vand.u32 %v1217, 65535
      %v1219 = vshra.s32 %v1217, 16
      %v1220 = vcvt.s32.f32 %v1218
      %v1221 = vcvt.s32.f32 %v1219
      %1222 = vmin.xlane.f32.xlu0 %v1221
      %v1223 = vpop.xlane.xlu0 %1222
      %vm1224 = vcmp.eq.f32.partialorder %v1221, %v1223
      %v1225 = vsel %vm1224, %v1220, inf
      %1226 = vmin.xlane.f32.xlu0 %v1225
      %v1227 = vpop.xlane.xlu0 %1226
      %v1228 = vcvt.f32.s32 %v1227
      %v1229 = vcvt.f32.s32 %v1223
      %v1230 = vshll.u32 %v1229, 16
      %v1231 = vadd.s32 %v1230, %v1228
      %vm1232 = vcmask 7168
      %1233 = vst.msk [vmem:[%s321] sm:$0xff] %vm1232, %v1006
      %1234 = vst.msk [vmem:[%s321 + $0x8] sm:$0xff] %vm1232, %v1021
      %1235 = vst.msk [vmem:[%s321 + $0x10] sm:$0xff] %vm1232, %v1036
      %1236 = vst.msk [vmem:[%s321 + $0x18] sm:$0xff] %vm1232, %v1051
      %1237 = vst.msk [vmem:[%s321 + $0x20] sm:$0xff] %vm1232, %v1066
      %1238 = vst.msk [vmem:[%s321 + $0x28] sm:$0xff] %vm1232, %v1081
      %1239 = vst.msk [vmem:[%s321 + $0x30] sm:$0xff] %vm1232, %v1096
      %1240 = vst.msk [vmem:[%s321 + $0x38] sm:$0xff] %vm1232, %v1111
      %1241 = vst.msk [vmem:[%s321 + $0x40] sm:$0xff] %vm1232, %v1126
      %1242 = vst.msk [vmem:[%s321 + $0x48] sm:$0xff] %vm1232, %v1141
      %1243 = vst.msk [vmem:[%s321 + $0x50] sm:$0xff] %vm1232, %v1156
      %1244 = vst.msk [vmem:[%s321 + $0x58] sm:$0xff] %vm1232, %v1171
      %1245 = vst.msk [vmem:[%s321 + $0x60] sm:$0xff] %vm1232, %v1186
      %1246 = vst.msk [vmem:[%s321 + $0x68] sm:$0xff] %vm1232, %v1201
      %1247 = vst.msk [vmem:[%s321 + $0x70] sm:$0xff] %vm1232, %v1216
      %1248 = vst.msk [vmem:[%s321 + $0x78] sm:$0xff] %vm1232, %v1231
      %v1249 = vsub.f32 %v870, %v912
      %v1250 = vsub.f32 %v872, %v915
      %v1251 = vsub.f32 %v875, %v918
      %v1252 = vsub.f32 %v877, %v921
      %v1253 = vsub.f32 %v880, %v924
      %v1254 = vsub.f32 %v882, %v927
      %v1255 = vsub.f32 %v885, %v930
      %v1256 = vsub.f32 %v887, %v933
      %v1257 = vsub.f32 %v890, %v936
      %v1258 = vsub.f32 %v892, %v939
      %v1259 = vsub.f32 %v895, %v942
      %v1260 = vsub.f32 %v897, %v945
      %v1261 = vsub.f32 %v900, %v948
      %v1262 = vsub.f32 %v902, %v951
      %v1263 = vsub.f32 %v905, %v954
      %v1264 = vsub.f32 %v907, %v957
      %v1265 = vmul.f32 %v1249, 1.442695
      %v1266 = vpow.pop %v1265
      %v1267 = vmul.f32 %v1250, 1.442695
      %v1268 = vpow.pop %v1267
      %v1269 = vmul.f32 %v1251, 1.442695
      %v1270 = vpow.pop %v1269
      %v1271 = vmul.f32 %v1252, 1.442695
      %v1272 = vpow.pop %v1271
      %v1273 = vmul.f32 %v1253, 1.442695
      %v1274 = vpow.pop %v1273
      %v1275 = vmul.f32 %v1254, 1.442695
      %v1276 = vpow.pop %v1275
      %v1277 = vmul.f32 %v1255, 1.442695
      %v1278 = vpow.pop %v1277
      %v1279 = vmul.f32 %v1256, 1.442695
      %v1280 = vpow.pop %v1279
      %v1281 = vmul.f32 %v1257, 1.442695
      %v1282 = vpow.pop %v1281
      %v1283 = vmul.f32 %v1258, 1.442695
      %v1284 = vpow.pop %v1283
      %v1285 = vmul.f32 %v1259, 1.442695
      %v1286 = vpow.pop %v1285
      %v1287 = vmul.f32 %v1260, 1.442695
      %v1288 = vpow.pop %v1287
      %v1289 = vmul.f32 %v1261, 1.442695
      %v1290 = vpow.pop %v1289
      %v1291 = vmul.f32 %v1262, 1.442695
      %v1292 = vpow.pop %v1291
      %v1293 = vmul.f32 %v1263, 1.442695
      %v1294 = vpow.pop %v1293
      %v1295 = vmul.f32 %v1264, 1.442695
      %v1296 = vpow.pop %v1295
      %v1297 = vsel %vm909, %v1266, 0.0
      %1298 = vadd.xlane.f32.xlu0 %v1297
      %v1299 = vpop.xlane.xlu0 %1298
      %v1300 = vsel %vm909, %v1268, 0.0
      %1301 = vadd.xlane.f32.xlu0 %v1300
      %v1302 = vpop.xlane.xlu0 %1301
      %v1303 = vsel %vm909, %v1270, 0.0
      %1304 = vadd.xlane.f32.xlu0 %v1303
      %v1305 = vpop.xlane.xlu0 %1304
      %v1306 = vsel %vm909, %v1272, 0.0
      %1307 = vadd.xlane.f32.xlu0 %v1306
      %v1308 = vpop.xlane.xlu0 %1307
      %v1309 = vsel %vm909, %v1274, 0.0
      %1310 = vadd.xlane.f32.xlu0 %v1309
      %v1311 = vpop.xlane.xlu0 %1310
      %v1312 = vsel %vm909, %v1276, 0.0
      %1313 = vadd.xlane.f32.xlu0 %v1312
      %v1314 = vpop.xlane.xlu0 %1313
      %v1315 = vsel %vm909, %v1278, 0.0
      %1316 = vadd.xlane.f32.xlu0 %v1315
      %v1317 = vpop.xlane.xlu0 %1316
      %v1318 = vsel %vm909, %v1280, 0.0
      %1319 = vadd.xlane.f32.xlu0 %v1318
      %v1320 = vpop.xlane.xlu0 %1319
      %v1321 = vsel %vm909, %v1282, 0.0
      %1322 = vadd.xlane.f32.xlu0 %v1321
      %v1323 = vpop.xlane.xlu0 %1322
      %v1324 = vsel %vm909, %v1284, 0.0
      %1325 = vadd.xlane.f32.xlu0 %v1324
      %v1326 = vpop.xlane.xlu0 %1325
      %v1327 = vsel %vm909, %v1286, 0.0
      %1328 = vadd.xlane.f32.xlu0 %v1327
      %v1329 = vpop.xlane.xlu0 %1328
      %v1330 = vsel %vm909, %v1288, 0.0
      %1331 = vadd.xlane.f32.xlu0 %v1330
      %v1332 = vpop.xlane.xlu0 %1331
      %v1333 = vsel %vm909, %v1290, 0.0
      %1334 = vadd.xlane.f32.xlu0 %v1333
      %v1335 = vpop.xlane.xlu0 %1334
      %v1336 = vsel %vm909, %v1292, 0.0
      %1337 = vadd.xlane.f32.xlu0 %v1336
      %v1338 = vpop.xlane.xlu0 %1337
      %v1339 = vsel %vm909, %v1294, 0.0
      %1340 = vadd.xlane.f32.xlu0 %v1339
      %v1341 = vpop.xlane.xlu0 %1340
      %v1342 = vsel %vm909, %v1296, 0.0
      %1343 = vadd.xlane.f32.xlu0 %v1342
      %v1344 = vpop.xlane.xlu0 %1343
      %v1345 = vrcp.pop %v1299
      %v1346 = vmul.f32 %v1299, %v1345
      %v1347 = vsub.f32 1.0, %v1346
      %v1348 = vmul.f32 %v1345, %v1347
      %v1349 = vadd.f32 %v1345, %v1348
      %vm1350 = vweird.f32 %v1299
      %vm1351 = vweird.f32 %v1345
      %vm1352 = vmor %vm1350, %vm1351
      %v1353 = vsel %vm1352, %v1345, %v1349
      %v1354 = vand.u32 2147483647, %v1299
      %vm1355 = vcmp.eq.f32.partialorder %v1354, 8.507059e+37
      %v1356 = vand.u32 %v1299, 2147483648
      %v1357 = vor.u32 1.1754944e-38, %v1356
      %v1358 = vsel %vm1355, %v1357, %v1353
      %v1359 = vrcp.pop %v1302
      %v1360 = vmul.f32 %v1302, %v1359
      %v1361 = vsub.f32 1.0, %v1360
      %v1362 = vmul.f32 %v1359, %v1361
      %v1363 = vadd.f32 %v1359, %v1362
      %vm1364 = vweird.f32 %v1302
      %vm1365 = vweird.f32 %v1359
      %vm1366 = vmor %vm1364, %vm1365
      %v1367 = vsel %vm1366, %v1359, %v1363
      %v1368 = vand.u32 2147483647, %v1302
      %vm1369 = vcmp.eq.f32.partialorder %v1368, 8.507059e+37
      %v1370 = vand.u32 %v1302, 2147483648
      %v1371 = vor.u32 1.1754944e-38, %v1370
      %v1372 = vsel %vm1369, %v1371, %v1367
      %v1373 = vrcp.pop %v1305
      %v1374 = vmul.f32 %v1305, %v1373
      %v1375 = vsub.f32 1.0, %v1374
      %v1376 = vmul.f32 %v1373, %v1375
      %v1377 = vadd.f32 %v1373, %v1376
      %vm1378 = vweird.f32 %v1305
      %vm1379 = vweird.f32 %v1373
      %vm1380 = vmor %vm1378, %vm1379
      %v1381 = vsel %vm1380, %v1373, %v1377
      %v1382 = vand.u32 2147483647, %v1305
      %vm1383 = vcmp.eq.f32.partialorder %v1382, 8.507059e+37
      %v1384 = vand.u32 %v1305, 2147483648
      %v1385 = vor.u32 1.1754944e-38, %v1384
      %v1386 = vsel %vm1383, %v1385, %v1381
      %v1387 = vrcp.pop %v1308
      %v1388 = vmul.f32 %v1308, %v1387
      %v1389 = vsub.f32 1.0, %v1388
      %v1390 = vmul.f32 %v1387, %v1389
      %v1391 = vadd.f32 %v1387, %v1390
      %vm1392 = vweird.f32 %v1308
      %vm1393 = vweird.f32 %v1387
      %vm1394 = vmor %vm1392, %vm1393
      %v1395 = vsel %vm1394, %v1387, %v1391
      %v1396 = vand.u32 2147483647, %v1308
      %vm1397 = vcmp.eq.f32.partialorder %v1396, 8.507059e+37
      %v1398 = vand.u32 %v1308, 2147483648
      %v1399 = vor.u32 1.1754944e-38, %v1398
      %v1400 = vsel %vm1397, %v1399, %v1395
      %v1401 = vrcp.pop %v1311
      %v1402 = vmul.f32 %v1311, %v1401
      %v1403 = vsub.f32 1.0, %v1402
      %v1404 = vmul.f32 %v1401, %v1403
      %v1405 = vadd.f32 %v1401, %v1404
      %vm1406 = vweird.f32 %v1311
      %vm1407 = vweird.f32 %v1401
      %vm1408 = vmor %vm1406, %vm1407
      %v1409 = vsel %vm1408, %v1401, %v1405
      %v1410 = vand.u32 2147483647, %v1311
      %vm1411 = vcmp.eq.f32.partialorder %v1410, 8.507059e+37
      %v1412 = vand.u32 %v1311, 2147483648
      %v1413 = vor.u32 1.1754944e-38, %v1412
      %v1414 = vsel %vm1411, %v1413, %v1409
      %v1415 = vrcp.pop %v1314
      %v1416 = vmul.f32 %v1314, %v1415
      %v1417 = vsub.f32 1.0, %v1416
      %v1418 = vmul.f32 %v1415, %v1417
      %v1419 = vadd.f32 %v1415, %v1418
      %vm1420 = vweird.f32 %v1314
      %vm1421 = vweird.f32 %v1415
      %vm1422 = vmor %vm1420, %vm1421
      %v1423 = vsel %vm1422, %v1415, %v1419
      %v1424 = vand.u32 2147483647, %v1314
      %vm1425 = vcmp.eq.f32.partialorder %v1424, 8.507059e+37
      %v1426 = vand.u32 %v1314, 2147483648
      %v1427 = vor.u32 1.1754944e-38, %v1426
      %v1428 = vsel %vm1425, %v1427, %v1423
      %v1429 = vrcp.pop %v1317
      %v1430 = vmul.f32 %v1317, %v1429
      %v1431 = vsub.f32 1.0, %v1430
      %v1432 = vmul.f32 %v1429, %v1431
      %v1433 = vadd.f32 %v1429, %v1432
      %vm1434 = vweird.f32 %v1317
      %vm1435 = vweird.f32 %v1429
      %vm1436 = vmor %vm1434, %vm1435
      %v1437 = vsel %vm1436, %v1429, %v1433
      %v1438 = vand.u32 2147483647, %v1317
      %vm1439 = vcmp.eq.f32.partialorder %v1438, 8.507059e+37
      %v1440 = vand.u32 %v1317, 2147483648
      %v1441 = vor.u32 1.1754944e-38, %v1440
      %v1442 = vsel %vm1439, %v1441, %v1437
      %v1443 = vrcp.pop %v1320
      %v1444 = vmul.f32 %v1320, %v1443
      %v1445 = vsub.f32 1.0, %v1444
      %v1446 = vmul.f32 %v1443, %v1445
      %v1447 = vadd.f32 %v1443, %v1446
      %vm1448 = vweird.f32 %v1320
      %vm1449 = vweird.f32 %v1443
      %vm1450 = vmor %vm1448, %vm1449
      %v1451 = vsel %vm1450, %v1443, %v1447
      %v1452 = vand.u32 2147483647, %v1320
      %vm1453 = vcmp.eq.f32.partialorder %v1452, 8.507059e+37
      %v1454 = vand.u32 %v1320, 2147483648
      %v1455 = vor.u32 1.1754944e-38, %v1454
      %v1456 = vsel %vm1453, %v1455, %v1451
      %v1457 = vrcp.pop %v1323
      %v1458 = vmul.f32 %v1323, %v1457
      %v1459 = vsub.f32 1.0, %v1458
      %v1460 = vmul.f32 %v1457, %v1459
      %v1461 = vadd.f32 %v1457, %v1460
      %vm1462 = vweird.f32 %v1323
      %vm1463 = vweird.f32 %v1457
      %vm1464 = vmor %vm1462, %vm1463
      %v1465 = vsel %vm1464, %v1457, %v1461
      %v1466 = vand.u32 2147483647, %v1323
      %vm1467 = vcmp.eq.f32.partialorder %v1466, 8.507059e+37
      %v1468 = vand.u32 %v1323, 2147483648
      %v1469 = vor.u32 1.1754944e-38, %v1468
      %v1470 = vsel %vm1467, %v1469, %v1465
      %v1471 = vrcp.pop %v1326
      %v1472 = vmul.f32 %v1326, %v1471
      %v1473 = vsub.f32 1.0, %v1472
      %v1474 = vmul.f32 %v1471, %v1473
      %v1475 = vadd.f32 %v1471, %v1474
      %vm1476 = vweird.f32 %v1326
      %vm1477 = vweird.f32 %v1471
      %vm1478 = vmor %vm1476, %vm1477
      %v1479 = vsel %vm1478, %v1471, %v1475
      %v1480 = vand.u32 2147483647, %v1326
      %vm1481 = vcmp.eq.f32.partialorder %v1480, 8.507059e+37
      %v1482 = vand.u32 %v1326, 2147483648
      %v1483 = vor.u32 1.1754944e-38, %v1482
      %v1484 = vsel %vm1481, %v1483, %v1479
      %v1485 = vrcp.pop %v1329
      %v1486 = vmul.f32 %v1329, %v1485
      %v1487 = vsub.f32 1.0, %v1486
      %v1488 = vmul.f32 %v1485, %v1487
      %v1489 = vadd.f32 %v1485, %v1488
      %vm1490 = vweird.f32 %v1329
      %vm1491 = vweird.f32 %v1485
      %vm1492 = vmor %vm1490, %vm1491
      %v1493 = vsel %vm1492, %v1485, %v1489
      %v1494 = vand.u32 2147483647, %v1329
      %vm1495 = vcmp.eq.f32.partialorder %v1494, 8.507059e+37
      %v1496 = vand.u32 %v1329, 2147483648
      %v1497 = vor.u32 1.1754944e-38, %v1496
      %v1498 = vsel %vm1495, %v1497, %v1493
      %v1499 = vrcp.pop %v1332
      %v1500 = vmul.f32 %v1332, %v1499
      %v1501 = vsub.f32 1.0, %v1500
      %v1502 = vmul.f32 %v1499, %v1501
      %v1503 = vadd.f32 %v1499, %v1502
      %vm1504 = vweird.f32 %v1332
      %vm1505 = vweird.f32 %v1499
      %vm1506 = vmor %vm1504, %vm1505
      %v1507 = vsel %vm1506, %v1499, %v1503
      %v1508 = vand.u32 2147483647, %v1332
      %vm1509 = vcmp.eq.f32.partialorder %v1508, 8.507059e+37
      %v1510 = vand.u32 %v1332, 2147483648
      %v1511 = vor.u32 1.1754944e-38, %v1510
      %v1512 = vsel %vm1509, %v1511, %v1507
      %v1513 = vrcp.pop %v1335
      %v1514 = vmul.f32 %v1335, %v1513
      %v1515 = vsub.f32 1.0, %v1514
      %v1516 = vmul.f32 %v1513, %v1515
      %v1517 = vadd.f32 %v1513, %v1516
      %vm1518 = vweird.f32 %v1335
      %vm1519 = vweird.f32 %v1513
      %vm1520 = vmor %vm1518, %vm1519
      %v1521 = vsel %vm1520, %v1513, %v1517
      %v1522 = vand.u32 2147483647, %v1335
      %vm1523 = vcmp.eq.f32.partialorder %v1522, 8.507059e+37
      %v1524 = vand.u32 %v1335, 2147483648
      %v1525 = vor.u32 1.1754944e-38, %v1524
      %v1526 = vsel %vm1523, %v1525, %v1521
      %v1527 = vrcp.pop %v1338
      %v1528 = vmul.f32 %v1338, %v1527
      %v1529 = vsub.f32 1.0, %v1528
      %v1530 = vmul.f32 %v1527, %v1529
      %v1531 = vadd.f32 %v1527, %v1530
      %vm1532 = vweird.f32 %v1338
      %vm1533 = vweird.f32 %v1527
      %vm1534 = vmor %vm1532, %vm1533
      %v1535 = vsel %vm1534, %v1527, %v1531
      %v1536 = vand.u32 2147483647, %v1338
      %vm1537 = vcmp.eq.f32.partialorder %v1536, 8.507059e+37
      %v1538 = vand.u32 %v1338, 2147483648
      %v1539 = vor.u32 1.1754944e-38, %v1538
      %v1540 = vsel %vm1537, %v1539, %v1535
      %v1541 = vrcp.pop %v1341
      %v1542 = vmul.f32 %v1341, %v1541
      %v1543 = vsub.f32 1.0, %v1542
      %v1544 = vmul.f32 %v1541, %v1543
      %v1545 = vadd.f32 %v1541, %v1544
      %vm1546 = vweird.f32 %v1341
      %vm1547 = vweird.f32 %v1541
      %vm1548 = vmor %vm1546, %vm1547
      %v1549 = vsel %vm1548, %v1541, %v1545
      %v1550 = vand.u32 2147483647, %v1341
      %vm1551 = vcmp.eq.f32.partialorder %v1550, 8.507059e+37
      %v1552 = vand.u32 %v1341, 2147483648
      %v1553 = vor.u32 1.1754944e-38, %v1552
      %v1554 = vsel %vm1551, %v1553, %v1549
      %v1555 = vrcp.pop %v1344
      %v1556 = vmul.f32 %v1344, %v1555
      %v1557 = vsub.f32 1.0, %v1556
      %v1558 = vmul.f32 %v1555, %v1557
      %v1559 = vadd.f32 %v1555, %v1558
      %vm1560 = vweird.f32 %v1344
      %vm1561 = vweird.f32 %v1555
      %vm1562 = vmor %vm1560, %vm1561
      %v1563 = vsel %vm1562, %v1555, %v1559
      %v1564 = vand.u32 2147483647, %v1344
      %vm1565 = vcmp.eq.f32.partialorder %v1564, 8.507059e+37
      %v1566 = vand.u32 %v1344, 2147483648
      %v1567 = vor.u32 1.1754944e-38, %v1566
      %v1568 = vsel %vm1565, %v1567, %v1563
      %v1569 = vmul.f32 %v1266, %v1358
      %v1570 = vmul.f32 %v1268, %v1372
      %v1571 = vmul.f32 %v1270, %v1386
      %v1572 = vmul.f32 %v1272, %v1400
      %v1573 = vmul.f32 %v1274, %v1414
      %v1574 = vmul.f32 %v1276, %v1428
      %v1575 = vmul.f32 %v1278, %v1442
      %v1576 = vmul.f32 %v1280, %v1456
      %v1577 = vmul.f32 %v1282, %v1470
      %v1578 = vmul.f32 %v1284, %v1484
      %v1579 = vmul.f32 %v1286, %v1498
      %v1580 = vmul.f32 %v1288, %v1512
      %v1581 = vmul.f32 %v1290, %v1526
      %v1582 = vmul.f32 %v1292, %v1540
      %v1583 = vmul.f32 %v1294, %v1554
      %v1584 = vmul.f32 %v1296, %v1568
      %1585 = vst.msk [vmem:[%s315] sm:$0xff] %vm909, %v1569
      %1586 = vst.msk [vmem:[%s315 + $0x8] sm:$0xff] %vm909, %v1570
      %1587 = vst.msk [vmem:[%s315 + $0x10] sm:$0xff] %vm909, %v1571
      %1588 = vst.msk [vmem:[%s315 + $0x18] sm:$0xff] %vm909, %v1572
      %1589 = vst.msk [vmem:[%s315 + $0x20] sm:$0xff] %vm909, %v1573
      %1590 = vst.msk [vmem:[%s315 + $0x28] sm:$0xff] %vm909, %v1574
      %1591 = vst.msk [vmem:[%s315 + $0x30] sm:$0xff] %vm909, %v1575
      %1592 = vst.msk [vmem:[%s315 + $0x38] sm:$0xff] %vm909, %v1576
      %1593 = vst.msk [vmem:[%s315 + $0x40] sm:$0xff] %vm909, %v1577
      %1594 = vst.msk [vmem:[%s315 + $0x48] sm:$0xff] %vm909, %v1578
      %1595 = vst.msk [vmem:[%s315 + $0x50] sm:$0xff] %vm909, %v1579
      %1596 = vst.msk [vmem:[%s315 + $0x58] sm:$0xff] %vm909, %v1580
      %1597 = vst.msk [vmem:[%s315 + $0x60] sm:$0xff] %vm909, %v1581
      %1598 = vst.msk [vmem:[%s315 + $0x68] sm:$0xff] %vm909, %v1582
      %1599 = vst.msk [vmem:[%s315 + $0x70] sm:$0xff] %vm909, %v1583
      %1600 = vst.msk [vmem:[%s315 + $0x78] sm:$0xff] %vm909, %v1584
      %s1601 = smul.u32 16, %s20
      %p1602 = scmp.lt.s32.totalorder %s1601, 31
      %s1603 = scalar_select %p1602, %s1601, 31
      %s1604 = smul.addr %s1603, 8
      %s1605 = scalar_lea.vmem %s7, %s1604
      %s1606 = smul.u32 16, %s20
      %p1607 = scmp.lt.s32.totalorder %s1606, 31
      %s1608 = scalar_select %p1607, %s1606, 31
      %s1609 = smul.addr %s1608, 8
      %s1610 = scalar_lea.vmem %s8, %s1609
      // Predicated region
      $region49: #{tpu_custom_call.1} parent=47 // pred_check
        %p1611 = pneg %p190
      $region50: #{tpu_custom_call.1} parent=47 // pred_check_branch
        %1613 = sbr.rel (%p1611) target = $region52
      $region51: #{tpu_custom_call.1} parent=47 // pred_region
        %s1614 = smul.u32 16, %s20
      $region52: #{tpu_custom_call.1} parent=47 // pred_fallthru
        _
      // Predicated region
      $region53: #{tpu_custom_call.1} parent=47 // pred_check
        %p1615 = pneg %p216
      $region54: #{tpu_custom_call.1} parent=47 // pred_check_branch
        %1617 = sbr.rel (%p1615) target = $region56
      $region55: #{tpu_custom_call.1} parent=47 // pred_region
        %s1618 = smul.u32 16, %s20
      $region56: #{tpu_custom_call.1} parent=47 // pred_fallthru
        _
    $region48: #{tpu_custom_call.1} parent=5 // pred_fallthru
      _
    %p1619 = scmp.le.s32.totalorder 2, %s15
    // Predicated region
    $region57: #{tpu_custom_call.1} parent=5 // pred_check
      %p1620 = pneg %p1619
    $region58: #{tpu_custom_call.1} parent=5 // pred_check_branch
      %1622 = sbr.rel (%p1620) target = $region60
    $region59: #{tpu_custom_call.1} parent=5 // pred_region
      %s1623 = ssub.s32 %s15, 2
      // Predicated region
      $region61: #{tpu_custom_call.1} parent=59 // pred_check
        %p1624 = pneg %p196
      $region62: #{tpu_custom_call.1} parent=59 // pred_check_branch
        %1626 = sbr.rel (%p1624) target = $region64
      $region63: #{tpu_custom_call.1} parent=59 // pred_region
        %s1627 = smul.u32 16, %s21
        %p1628 = scmp.lt.s32.totalorder %s1627, 31
        %s1629 = scalar_select %p1628, %s1627, 31
        %s1630 = smul.addr %s1629, 8
        %s1631 = scalar_lea.vmem %s7, %s1630
      $region64: #{tpu_custom_call.1} parent=59 // pred_fallthru
        _
      // Predicated region
      $region65: #{tpu_custom_call.1} parent=59 // pred_check
        %p1632 = pneg %p222
      $region66: #{tpu_custom_call.1} parent=59 // pred_check_branch
        %1634 = sbr.rel (%p1632) target = $region68
      $region67: #{tpu_custom_call.1} parent=59 // pred_region
        %s1635 = smul.u32 16, %s21
        %p1636 = scmp.lt.s32.totalorder %s1635, 31
        %s1637 = scalar_select %p1636, %s1635, 31
        %s1638 = smul.addr %s1637, 8
        %s1639 = scalar_lea.vmem %s8, %s1638
      $region68: #{tpu_custom_call.1} parent=59 // pred_fallthru
        _
    $region60: #{tpu_custom_call.1} parent=5 // pred_fallthru
      _
  $region6: #{tpu_custom_call.1} parent=0 // loop_footer
    %s19 = sadd.s32 1, %s15
  $region7: #{tpu_custom_call.1} parent=0 // loop_footer_branch
    %14 = sbr.rel target = $region3
  $region8: #{tpu_custom_call.1} parent=0 // loop_exit
    _

</llo_original>
